<compile_context>
chip_gen: v6e
topology: v6e:2x2x1
jax: 0.10.0
libtpu: 0.0.40
codegen_flags: <defaults>
</compile_context>

<pallas_src>
import jax
import jax.numpy as jnp
from jax.experimental import pallas as pl
from jax.experimental.pallas import tpu as pltpu


def _round_up(x, m):
    return (x + m - 1) // m * m


# ---------------------------------------------------------------------------
# Pallas kernel: MLP stack (1x1 conv + BN(train) + ReLU) + max over K
# ---------------------------------------------------------------------------
def _make_msg_mlp_kernel(n_layers, K, tm, n_tiles, count, c0p, coutp, eps=1e-5):
    L = n_layers
    inv_count = 1.0 / float(count)

    def kernel(*refs):
        mask_ref = refs[0]                    # (tm, 1)  f32 row-validity mask
        x_ref = refs[1]                       # (K, tm, c0p) bf16
        wb = refs[2:2 + 2 * L]                # W_l (cin_p, cout_p) bf16, b_l (1, cout_p) f32
        out_ref = refs[2 + 2 * L]             # (tm, coutp[-1]) f32
        stats = refs[3 + 2 * L:]              # 2L scratch refs, (1, coutp[l]) f32 each

        phase = pl.program_id(0)
        tile = pl.program_id(1)

        x2 = x_ref[...].reshape(K * tm, c0p)          # bf16, k-major rows
        mask3 = mask_ref[...].reshape(1, tm, 1)       # f32

        def run_layers(n):
            # Apply layers 0..n-1 using finalized (mean, inv_std) from scratch.
            h = x2
            for l in range(n):
                z = jnp.dot(h.astype(jnp.bfloat16), wb[2 * l][...],
                            preferred_element_type=jnp.float32) + wb[2 * l + 1][...]
                h = jnp.maximum((z - stats[2 * l][...]) * stats[2 * l + 1][...], 0.0)
            return h

        # --- stats phases: fused per-channel sum / sum-of-squares per layer ---
        for p in range(L):
            @pl.when(phase == p)
            def _stats(p=p):
                @pl.when(tile == 0)
                def _init():
                    stats[2 * p][...] = jnp.zeros_like(stats[2 * p])
                    stats[2 * p + 1][...] = jnp.zeros_like(stats[2 * p + 1])

                h = run_layers(p)
                z = jnp.dot(h.astype(jnp.bfloat16), wb[2 * p][...],
                            preferred_element_type=jnp.float32) + wb[2 * p + 1][...]
                zm = z.reshape(K, tm, coutp[p]) * mask3      # mask out padded rows
                s_kt = zm.sum(axis=0)                        # (tm, cp)
                ss_kt = (zm * zm).sum(axis=0)                # (tm, cp)
                stats[2 * p][...] += s_kt.sum(axis=0, keepdims=True)
                stats[2 * p + 1][...] += ss_kt.sum(axis=0, keepdims=True)

                @pl.when(tile == n_tiles - 1)
                def _finalize():
                    mean = stats[2 * p][...] * inv_count
                    var = jnp.maximum(
                        stats[2 * p + 1][...] * inv_count - mean * mean, 0.0)
                    stats[2 * p][...] = mean
                    stats[2 * p + 1][...] = jax.lax.rsqrt(var + eps)

        # --- final phase: full normalized stack + max over K neighbours ---
        @pl.when(phase == L)
        def _final():
            h = run_layers(L)                                # (K*tm, coutp[-1]) f32
            out_ref[...] = jnp.max(h.reshape(K, tm, coutp[-1]), axis=0)

    return kernel


def msg_mlp_maxpool(grouped_kmc, weights, biases, *, tm_max=512):
    """grouped_kmc: [K, M, C0] f32 -> [M, C_last] f32 (conv/BN/ReLU stack + max over K)."""
    K, M, C0 = grouped_kmc.shape
    L = len(weights)
    c_in = [w.shape[0] for w in weights]
    c_out = [w.shape[1] for w in weights]

    # Lane-dense channel padding (multiples of 128) and sublane-friendly row tiling.
    c0p = _round_up(C0, 128)
    coutp = [_round_up(c, 128) for c in c_out]
    cinp = [c0p] + coutp[:-1]
    tm = min(tm_max, _round_up(M, 16))
    m_pad = _round_up(M, tm)
    n_tiles = m_pad // tm

    slab = jnp.pad(grouped_kmc.astype(jnp.bfloat16),
                   ((0, 0), (0, m_pad - M), (0, c0p - C0)))
    row_mask = (jnp.arange(m_pad) < M).astype(jnp.float32)[:, None]  # (m_pad, 1)

    args = [row_mask, slab]
    in_specs = [
        pl.BlockSpec((tm, 1), lambda p, t: (t, 0)),
        pl.BlockSpec((K, tm, c0p), lambda p, t: (0, t, 0)),
    ]
    for l in range(L):
        w_p = jnp.pad(weights[l].astype(jnp.bfloat16),
                      ((0, cinp[l] - c_in[l]), (0, coutp[l] - c_out[l])))
        b_p = jnp.pad(biases[l].astype(jnp.float32),
                      ((0, 0), (0, coutp[l] - c_out[l])))
        args += [w_p, b_p]
        in_specs += [pl.BlockSpec((cinp[l], coutp[l]), lambda p, t: (0, 0)),
                     pl.BlockSpec((1, coutp[l]), lambda p, t: (0, 0))]

    kernel = _make_msg_mlp_kernel(L, K, tm, n_tiles, K * M, c0p, coutp)

    out = pl.pallas_call(
        kernel,
        grid=(L + 1, n_tiles),
        in_specs=in_specs,
        out_specs=pl.BlockSpec((tm, coutp[-1]), lambda p, t: (t, 0)),
        out_shape=jax.ShapeDtypeStruct((m_pad, coutp[-1]), jnp.float32),
        scratch_shapes=[pltpu.VMEM((1, coutp[l // 2]), jnp.float32)
                        for l in range(2 * L)],
        compiler_params=pltpu.CompilerParams(
            dimension_semantics=("arbitrary", "arbitrary"),
            vmem_limit_bytes=32 * 1024 * 1024),
    )(*args)
    return out[:M, :c_out[-1]]


# ---------------------------------------------------------------------------
# Plain-JAX glue (data-dependent sampling / grouping)
# ---------------------------------------------------------------------------
def index_points(points, idx):
    # points: [B, N, C], idx: [B, ...] -> [B, ..., C]
    B = points.shape[0]
    batch_idx = jnp.arange(B).reshape((B,) + (1,) * (idx.ndim - 1))
    return points[batch_idx, idx]


def farthest_point_sample(xyz, npoint):
    # xyz: [B, N, 3] -> [B, npoint] int32
    # TODO(synk): reference FPS starts from a random index; we start at 0 for determinism.
    B, N, _ = xyz.shape

    def body(i, carry):
        distance, farthest, centroids = carry
        centroids = centroids.at[:, i].set(farthest)
        centroid = jnp.take_along_axis(xyz, farthest[:, None, None], axis=1)  # [B,1,3]
        dist = jnp.sum((xyz - centroid) ** 2, axis=-1)
        distance = jnp.minimum(distance, dist)
        farthest = jnp.argmax(distance, axis=-1).astype(jnp.int32)
        return distance, farthest, centroids

    init = (jnp.full((B, N), 1e10, dtype=jnp.float32),
            jnp.zeros((B,), jnp.int32),
            jnp.zeros((B, npoint), jnp.int32))
    _, _, centroids = jax.lax.fori_loop(0, npoint, body, init)
    return centroids


def square_distance(src, dst):
    # src [B,S,3], dst [B,N,3] -> [B,S,N]
    return jnp.sum((src[:, :, None, :] - dst[:, None, :, :]) ** 2, axis=-1)


def query_ball_point(radius, nsample, xyz, new_xyz):
    B, N, _ = xyz.shape
    S = new_xyz.shape[1]
    sqrdists = square_distance(new_xyz, xyz)
    group_idx = jnp.broadcast_to(jnp.arange(N, dtype=jnp.int32), (B, S, N))
    group_idx = jnp.where(sqrdists > radius ** 2, jnp.int32(N), group_idx)
    group_idx = jnp.sort(group_idx, axis=-1)[:, :, :nsample]
    group_first = group_idx[:, :, 0:1]
    group_idx = jnp.where(group_idx == N, group_first, group_idx)
    return group_idx


def pointnet_sa_msg(xyd, xyzd, pointsd, npoint, radius_list, nsample_list, scale_params):
    # channel-first inputs: xyd [B,2,n], xyzd [B,3,n], pointsd [B,Cin,n]
    B, _, n = xyzd.shape
    xy_nc = jnp.transpose(xyd, (0, 2, 1))
    xyz_nc = jnp.transpose(xyzd, (0, 2, 1))
    pts_nc = jnp.transpose(pointsd, (0, 2, 1))

    S = npoint
    fps_idx = farthest_point_sample(xyz_nc, S)     # [B,S]
    new_xyz = index_points(xyz_nc, fps_idx)        # [B,S,3]
    new_xy = index_points(xy_nc, fps_idx)          # [B,S,2]
    M = B * S

    outs = []
    for i, (radius, K) in enumerate(zip(radius_list, nsample_list)):
        group_idx = query_ball_point(radius, K, xyz_nc, new_xyz)                # [B,S,K]
        grouped_xyz = index_points(xyz_nc, group_idx) - new_xyz[:, :, None, :]  # [B,S,K,3]
        grouped_pts = index_points(pts_nc, group_idx)                           # [B,S,K,Cin]
        grouped = jnp.concatenate([grouped_pts, grouped_xyz], axis=-1)          # [B,S,K,Cin+3]
        # k-major 3-D slab [K, M, C0]; kernel reduces over K with jnp.max(axis=0)
        slab = jnp.transpose(grouped, (2, 0, 1, 3)).reshape(K, M, grouped.shape[-1])
        weights, biases = scale_params[i]
        out = msg_mlp_maxpool(slab.astype(jnp.float32), weights, biases)        # [M, Clast]
        out = out.reshape(B, S, -1)
        outs.append(jnp.transpose(out, (0, 2, 1)))                              # [B, Clast, S]

    l_points = jnp.concatenate(outs, axis=1)
    l_xyz = jnp.transpose(new_xyz, (0, 2, 1))
    l_xy = jnp.transpose(new_xy, (0, 2, 1))
    return l_xy, l_xyz, l_points


def pointnetpp_msg_forward(xy, xyz, points, point_split,
                           radius_list, nsample_list, mlp_list, all_params):
    new_xy, new_xyz, new_points = [], [], []
    split = [0]
    for seg in range(len(point_split) - 1):
        start, end = int(point_split[seg]), int(point_split[seg + 1])
        xyd = xy[:, :2, start:end]
        xyzd = xyz[:, :3, start:end]
        pointsd = points[:, :, start:end]
        n = end - start
        npoint = n // 2 + 2
        l_xy, l_xyz, l_pts = pointnet_sa_msg(
            xyd, xyzd, pointsd, npoint, radius_list, nsample_list, all_params[seg])
        split.append(split[-1] + l_xyz.shape[2])
        new_xy.append(l_xy)
        new_xyz.append(l_xyz)
        new_points.append(l_pts)
    return (jnp.concatenate(new_xy, axis=-1),
            jnp.concatenate(new_xyz, axis=-1),
            jnp.concatenate(new_points, axis=-1),
            jnp.asarray(split, dtype=jnp.int32))


# ---------------------------------------------------------------------------
# Deterministic parameter init (fresh SA module per segment, like the reference)
# ---------------------------------------------------------------------------
def init_params(key, n_segments, in_channel, mlp_list):
    all_params = []
    for _seg in range(n_segments):
        scale_params = []
        for mlp in mlp_list:
            ws, bs = [], []
            last = in_channel + 3
            for out_ch in mlp:
                key, kw, kb = jax.random.split(key, 3)
                bound = 1.0 / (last ** 0.5)
                ws.append(jax.random.uniform(kw, (last, out_ch), jnp.float32, -bound, bound))
                bs.append(jax.random.uniform(kb, (1, out_ch), jnp.float32, -bound, bound))
                last = out_ch
            scale_params.append((ws, bs))
        all_params.append(scale_params)
    return all_params


if __name__ == "__main__":
    key = jax.random.PRNGKey(0)
    B, N, Cin = 2, 40, 4
    radius_list = [0.8, 1.6]
    nsample_list = [4, 8]
    mlp_list = [[8, 16], [8, 32]]
    point_split = [0, 12, 40]   # two segments: n=12 -> S=8, n=28 -> S=16

    k1, k2, k3, kp = jax.random.split(key, 4)
    xy = jax.random.normal(k1, (B, 2, N), jnp.float32)
    xyz = jax.random.normal(k2, (B, 3, N), jnp.float32)
    points = jax.random.normal(k3, (B, Cin, N), jnp.float32)
    params = init_params(kp, len(point_split) - 1, Cin, mlp_list)

    new_xy, new_xyz, new_points, split = pointnetpp_msg_forward(
        xy, xyz, points, point_split, radius_list, nsample_list, mlp_list, params)
    jax.block_until_ready((new_xy, new_xyz, new_points, split))

    total_S = sum(int(point_split[i + 1] - point_split[i]) // 2 + 2
                  for i in range(len(point_split) - 1))
    assert new_xy.shape == (B, 2, total_S)
    assert new_xyz.shape == (B, 3, total_S)
    assert new_points.shape == (B, sum(m[-1] for m in mlp_list), total_S)
    assert split.shape == (len(point_split),)
    print("KERNEL_OK")
</pallas_src>

<mosaic_0001>
module attributes {stable_mosaic.version = 11 : i64} {
  func.func @kernel(%arg0: i32, %arg1: i32, %arg2: memref<16x1xf32, #tpu.memory_space<vmem>>, %arg3: memref<4x16x128xbf16, #tpu.memory_space<vmem>>, %arg4: memref<128x128xbf16, #tpu.memory_space<vmem>>, %arg5: memref<1x128xf32, #tpu.memory_space<vmem>>, %arg6: memref<128x128xbf16, #tpu.memory_space<vmem>>, %arg7: memref<1x128xf32, #tpu.memory_space<vmem>>, %arg8: memref<16x128xf32, #tpu.memory_space<vmem>>, %arg9: memref<1x128xf32, #tpu.memory_space<vmem>>, %arg10: memref<1x128xf32, #tpu.memory_space<vmem>>, %arg11: memref<1x128xf32, #tpu.memory_space<vmem>>, %arg12: memref<1x128xf32, #tpu.memory_space<vmem>>) attributes {dimension_semantics = [#tpu.dimension_semantics<arbitrary>, #tpu.dimension_semantics<arbitrary>], iteration_bounds = array<i64: 3, 1>, scalar_prefetch = 0 : i64, scratch_operands = 4 : i64, tpu.core_type = #tpu.core_type<tc>, window_params = [{transform_indices = @transform_0, window_bounds = array<i64: 16, 1>}, {transform_indices = @transform_1, window_bounds = array<i64: 4, 16, 128>}, {pipeline_mode = #tpu.pipeline_mode<synchronous>, transform_indices = @transform_2, window_bounds = array<i64: 128, 128>}, {pipeline_mode = #tpu.pipeline_mode<synchronous>, transform_indices = @transform_3, window_bounds = array<i64: 1, 128>}, {pipeline_mode = #tpu.pipeline_mode<synchronous>, transform_indices = @transform_4, window_bounds = array<i64: 128, 128>}, {pipeline_mode = #tpu.pipeline_mode<synchronous>, transform_indices = @transform_5, window_bounds = array<i64: 1, 128>}, {transform_indices = @transform_6, window_bounds = array<i64: 16, 128>}]} {
    %c0 = arith.constant 0 : index
    %c0_0 = arith.constant 0 : index
    %c0_1 = arith.constant 0 : index
    %0 = vector.load %arg3[%c0, %c0_0, %c0_1] : memref<4x16x128xbf16, #tpu.memory_space<vmem>>, vector<4x16x128xbf16>
    %1 = vector.shape_cast %0 : vector<4x16x128xbf16> to vector<64x128xbf16>
    %c0_2 = arith.constant 0 : index
    %c0_3 = arith.constant 0 : index
    %2 = vector.load %arg2[%c0_2, %c0_3] : memref<16x1xf32, #tpu.memory_space<vmem>>, vector<16x1xf32>
    %3 = vector.shape_cast %2 : vector<16x1xf32> to vector<1x16x1xf32>
    %c0_i32 = arith.constant 0 : i32
    %4 = arith.cmpi eq, %arg0, %c0_i32 : i32
    %5 = arith.extui %4 : i1 to i32
    %c0_i32_4 = arith.constant 0 : i32
    %6 = arith.cmpi ne, %5, %c0_i32_4 : i32
    scf.if %6 {
      %c0_i32_7 = arith.constant 0 : i32
      %13 = arith.cmpi eq, %arg1, %c0_i32_7 : i32
      %14 = arith.extui %13 : i1 to i32
      %c0_i32_8 = arith.constant 0 : i32
      %15 = arith.cmpi ne, %14, %c0_i32_8 : i32
      scf.if %15 {
        %cst_27 = arith.constant 0.000000e+00 : f32
        %40 = vector.broadcast %cst_27 : f32 to vector<1x128xf32>
        %c0_28 = arith.constant 0 : index
        %c0_29 = arith.constant 0 : index
        %41 = vector.load %arg9[%c0_28, %c0_29] : memref<1x128xf32, #tpu.memory_space<vmem>>, vector<1x128xf32>
        tpu.vector_store %arg9[%c0_28, %c0_29], %40 {strides = array<i32>} : memref<1x128xf32, #tpu.memory_space<vmem>>, vector<1x128xf32>,
        %cst_30 = arith.constant 0.000000e+00 : f32
        %42 = vector.broadcast %cst_30 : f32 to vector<1x128xf32>
        %c0_31 = arith.constant 0 : index
        %c0_32 = arith.constant 0 : index
        %43 = vector.load %arg10[%c0_31, %c0_32] : memref<1x128xf32, #tpu.memory_space<vmem>>, vector<1x128xf32>
        tpu.vector_store %arg10[%c0_31, %c0_32], %42 {strides = array<i32>} : memref<1x128xf32, #tpu.memory_space<vmem>>, vector<1x128xf32>,
      } else {
      }
      %c0_9 = arith.constant 0 : index
      %c0_10 = arith.constant 0 : index
      %16 = vector.load %arg4[%c0_9, %c0_10] : memref<128x128xbf16, #tpu.memory_space<vmem>>, vector<128x128xbf16>
      %cst = arith.constant dense<0.000000e+00> : vector<64x128xf32>
      %17 = tpu.matmul %1, %16, %cst {dimension_numbers = #tpu.dot_dimension_numbers<[1], [0], [0], [1], [0, 0, 1, 1], [], []>} : vector<64x128xbf16>, vector<128x128xbf16>, vector<64x128xf32> -> vector<64x128xf32>
      %c0_11 = arith.constant 0 : index
      %c0_12 = arith.constant 0 : index
      %18 = vector.load %arg5[%c0_11, %c0_12] : memref<1x128xf32, #tpu.memory_space<vmem>>, vector<1x128xf32>
      %19 = vector.broadcast %18 : vector<1x128xf32> to vector<64x128xf32>
      %20 = arith.addf %17, %19 : vector<64x128xf32>
      %21 = vector.shape_cast %20 : vector<64x128xf32> to vector<4x16x128xf32>
      %22 = vector.broadcast %3 : vector<1x16x1xf32> to vector<4x16x128xf32>
      %23 = arith.mulf %21, %22 : vector<4x16x128xf32>
      %cst_13 = arith.constant dense<0.000000e+00> : vector<16x128xf32>
      %24 = vector.multi_reduction <add>, %23, %cst_13 [0] : vector<4x16x128xf32> to vector<16x128xf32>
      %25 = arith.mulf %23, %23 : vector<4x16x128xf32>
      %cst_14 = arith.constant dense<0.000000e+00> : vector<16x128xf32>
      %26 = vector.multi_reduction <add>, %25, %cst_14 [0] : vector<4x16x128xf32> to vector<16x128xf32>
      %c0_15 = arith.constant 0 : index
      %c0_16 = arith.constant 0 : index
      %27 = vector.load %arg9[%c0_15, %c0_16] : memref<1x128xf32, #tpu.memory_space<vmem>>, vector<1x128xf32>
      %cst_17 = arith.constant dense<0.000000e+00> : vector<128xf32>
      %28 = vector.multi_reduction <add>, %24, %cst_17 [0] : vector<16x128xf32> to vector<128xf32>
      %29 = vector.shape_cast %28 : vector<128xf32> to vector<1x128xf32>
      %30 = arith.addf %27, %29 : vector<1x128xf32>
      %c0_18 = arith.constant 0 : index
      %c0_19 = arith.constant 0 : index
      %31 = vector.load %arg9[%c0_18, %c0_19] : memref<1x128xf32, #tpu.memory_space<vmem>>, vector<1x128xf32>
      tpu.vector_store %arg9[%c0_18, %c0_19], %30 {strides = array<i32>} : memref<1x128xf32, #tpu.memory_space<vmem>>, vector<1x128xf32>,
      %c0_20 = arith.constant 0 : index
      %c0_21 = arith.constant 0 : index
      %32 = vector.load %arg10[%c0_20, %c0_21] : memref<1x128xf32, #tpu.memory_space<vmem>>, vector<1x128xf32>
      %cst_22 = arith.constant dense<0.000000e+00> : vector<128xf32>
      %33 = vector.multi_reduction <add>, %26, %cst_22 [0] : vector<16x128xf32> to vector<128xf32>
      %34 = vector.shape_cast %33 : vector<128xf32> to vector<1x128xf32>
      %35 = arith.addf %32, %34 : vector<1x128xf32>
      %c0_23 = arith.constant 0 : index
      %c0_24 = arith.constant 0 : index
      %36 = vector.load %arg10[%c0_23, %c0_24] : memref<1x128xf32, #tpu.memory_space<vmem>>, vector<1x128xf32>
      tpu.vector_store %arg10[%c0_23, %c0_24], %35 {strides = array<i32>} : memref<1x128xf32, #tpu.memory_space<vmem>>, vector<1x128xf32>,
      %c0_i32_25 = arith.constant 0 : i32
      %37 = arith.cmpi eq, %arg1, %c0_i32_25 : i32
      %38 = arith.extui %37 : i1 to i32
      %c0_i32_26 = arith.constant 0 : i32
      %39 = arith.cmpi ne, %38, %c0_i32_26 : i32
      scf.if %39 {
        %c0_27 = arith.constant 0 : index
        %c0_28 = arith.constant 0 : index
        %40 = vector.load %arg9[%c0_27, %c0_28] : memref<1x128xf32, #tpu.memory_space<vmem>>, vector<1x128xf32>
        %cst_29 = arith.constant 1.562500e-02 : f32
        %41 = vector.broadcast %cst_29 : f32 to vector<1x128xf32>
        %42 = arith.mulf %40, %41 : vector<1x128xf32>
        %c0_30 = arith.constant 0 : index
        %c0_31 = arith.constant 0 : index
        %43 = vector.load %arg10[%c0_30, %c0_31] : memref<1x128xf32, #tpu.memory_space<vmem>>, vector<1x128xf32>
        %cst_32 = arith.constant 1.562500e-02 : f32
        %44 = vector.broadcast %cst_32 : f32 to vector<1x128xf32>
        %45 = arith.mulf %43, %44 : vector<1x128xf32>
        %46 = arith.mulf %42, %42 : vector<1x128xf32>
        %47 = arith.subf %45, %46 : vector<1x128xf32>
        %cst_33 = arith.constant 0.000000e+00 : f32
        %48 = vector.broadcast %cst_33 : f32 to vector<1x128xf32>
        %49 = arith.maximumf %47, %48 : vector<1x128xf32>
        %c0_34 = arith.constant 0 : index
        %c0_35 = arith.constant 0 : index
        %50 = vector.load %arg9[%c0_34, %c0_35] : memref<1x128xf32, #tpu.memory_space<vmem>>, vector<1x128xf32>
        tpu.vector_store %arg9[%c0_34, %c0_35], %42 {strides = array<i32>} : memref<1x128xf32, #tpu.memory_space<vmem>>, vector<1x128xf32>,
        %cst_36 = arith.constant 9.99999974E-6 : f32
        %51 = vector.broadcast %cst_36 : f32 to vector<1x128xf32>
        %52 = arith.addf %49, %51 : vector<1x128xf32>
        %53 = math.rsqrt %52 : vector<1x128xf32>
        %c0_37 = arith.constant 0 : index
        %c0_38 = arith.constant 0 : index
        %54 = vector.load %arg10[%c0_37, %c0_38] : memref<1x128xf32, #tpu.memory_space<vmem>>, vector<1x128xf32>
        tpu.vector_store %arg10[%c0_37, %c0_38], %53 {strides = array<i32>} : memref<1x128xf32, #tpu.memory_space<vmem>>, vector<1x128xf32>,
      } else {
      }
    } else {
    }
    %c1_i32 = arith.constant 1 : i32
    %7 = arith.cmpi eq, %arg0, %c1_i32 : i32
    %8 = arith.extui %7 : i1 to i32
    %c0_i32_5 = arith.constant 0 : i32
    %9 = arith.cmpi ne, %8, %c0_i32_5 : i32
    scf.if %9 {
      %c0_i32_7 = arith.constant 0 : i32
      %13 = arith.cmpi eq, %arg1, %c0_i32_7 : i32
      %14 = arith.extui %13 : i1 to i32
      %c0_i32_8 = arith.constant 0 : i32
      %15 = arith.cmpi ne, %14, %c0_i32_8 : i32
      scf.if %15 {
        %cst_37 = arith.constant 0.000000e+00 : f32
        %54 = vector.broadcast %cst_37 : f32 to vector<1x128xf32>
        %c0_38 = arith.constant 0 : index
        %c0_39 = arith.constant 0 : index
        %55 = vector.load %arg11[%c0_38, %c0_39] : memref<1x128xf32, #tpu.memory_space<vmem>>, vector<1x128xf32>
        tpu.vector_store %arg11[%c0_38, %c0_39], %54 {strides = array<i32>} : memref<1x128xf32, #tpu.memory_space<vmem>>, vector<1x128xf32>,
        %cst_40 = arith.constant 0.000000e+00 : f32
        %56 = vector.broadcast %cst_40 : f32 to vector<1x128xf32>
        %c0_41 = arith.constant 0 : index
        %c0_42 = arith.constant 0 : index
        %57 = vector.load %arg12[%c0_41, %c0_42] : memref<1x128xf32, #tpu.memory_space<vmem>>, vector<1x128xf32>
        tpu.vector_store %arg12[%c0_41, %c0_42], %56 {strides = array<i32>} : memref<1x128xf32, #tpu.memory_space<vmem>>, vector<1x128xf32>,
      } else {
      }
      %c0_9 = arith.constant 0 : index
      %c0_10 = arith.constant 0 : index
      %16 = vector.load %arg4[%c0_9, %c0_10] : memref<128x128xbf16, #tpu.memory_space<vmem>>, vector<128x128xbf16>
      %cst = arith.constant dense<0.000000e+00> : vector<64x128xf32>
      %17 = tpu.matmul %1, %16, %cst {dimension_numbers = #tpu.dot_dimension_numbers<[1], [0], [0], [1], [0, 0, 1, 1], [], []>} : vector<64x128xbf16>, vector<128x128xbf16>, vector<64x128xf32> -> vector<64x128xf32>
      %c0_11 = arith.constant 0 : index
      %c0_12 = arith.constant 0 : index
      %18 = vector.load %arg5[%c0_11, %c0_12] : memref<1x128xf32, #tpu.memory_space<vmem>>, vector<1x128xf32>
      %19 = vector.broadcast %18 : vector<1x128xf32> to vector<64x128xf32>
      %20 = arith.addf %17, %19 : vector<64x128xf32>
      %c0_13 = arith.constant 0 : index
      %c0_14 = arith.constant 0 : index
      %21 = vector.load %arg9[%c0_13, %c0_14] : memref<1x128xf32, #tpu.memory_space<vmem>>, vector<1x128xf32>
      %22 = vector.broadcast %21 : vector<1x128xf32> to vector<64x128xf32>
      %23 = arith.subf %20, %22 : vector<64x128xf32>
      %c0_15 = arith.constant 0 : index
      %c0_16 = arith.constant 0 : index
      %24 = vector.load %arg10[%c0_15, %c0_16] : memref<1x128xf32, #tpu.memory_space<vmem>>, vector<1x128xf32>
      %25 = vector.broadcast %24 : vector<1x128xf32> to vector<64x128xf32>
      %26 = arith.mulf %23, %25 : vector<64x128xf32>
      %cst_17 = arith.constant 0.000000e+00 : f32
      %27 = vector.broadcast %cst_17 : f32 to vector<64x128xf32>
      %28 = arith.maximumf %26, %27 : vector<64x128xf32>
      %29 = arith.truncf %28 : vector<64x128xf32> to vector<64x128xbf16>
      %c0_18 = arith.constant 0 : index
      %c0_19 = arith.constant 0 : index
      %30 = vector.load %arg6[%c0_18, %c0_19] : memref<128x128xbf16, #tpu.memory_space<vmem>>, vector<128x128xbf16>
      %cst_20 = arith.constant dense<0.000000e+00> : vector<64x128xf32>
      %31 = tpu.matmul %29, %30, %cst_20 {dimension_numbers = #tpu.dot_dimension_numbers<[1], [0], [0], [1], [0, 0, 1, 1], [], []>} : vector<64x128xbf16>, vector<128x128xbf16>, vector<64x128xf32> -> vector<64x128xf32>
      %c0_21 = arith.constant 0 : index
      %c0_22 = arith.constant 0 : index
      %32 = vector.load %arg7[%c0_21, %c0_22] : memref<1x128xf32, #tpu.memory_space<vmem>>, vector<1x128xf32>
      %33 = vector.broadcast %32 : vector<1x128xf32> to vector<64x128xf32>
      %34 = arith.addf %31, %33 : vector<64x128xf32>
      %35 = vector.shape_cast %34 : vector<64x128xf32> to vector<4x16x128xf32>
      %36 = vector.broadcast %3 : vector<1x16x1xf32> to vector<4x16x128xf32>
      %37 = arith.mulf %35, %36 : vector<4x16x128xf32>
      %cst_23 = arith.constant dense<0.000000e+00> : vector<16x128xf32>
      %38 = vector.multi_reduction <add>, %37, %cst_23 [0] : vector<4x16x128xf32> to vector<16x128xf32>
      %39 = arith.mulf %37, %37 : vector<4x16x128xf32>
      %cst_24 = arith.constant dense<0.000000e+00> : vector<16x128xf32>
      %40 = vector.multi_reduction <add>, %39, %cst_24 [0] : vector<4x16x128xf32> to vector<16x128xf32>
      %c0_25 = arith.constant 0 : index
      %c0_26 = arith.constant 0 : index
      %41 = vector.load %arg11[%c0_25, %c0_26] : memref<1x128xf32, #tpu.memory_space<vmem>>, vector<1x128xf32>
      %cst_27 = arith.constant dense<0.000000e+00> : vector<128xf32>
      %42 = vector.multi_reduction <add>, %38, %cst_27 [0] : vector<16x128xf32> to vector<128xf32>
      %43 = vector.shape_cast %42 : vector<128xf32> to vector<1x128xf32>
      %44 = arith.addf %41, %43 : vector<1x128xf32>
      %c0_28 = arith.constant 0 : index
      %c0_29 = arith.constant 0 : index
      %45 = vector.load %arg11[%c0_28, %c0_29] : memref<1x128xf32, #tpu.memory_space<vmem>>, vector<1x128xf32>
      tpu.vector_store %arg11[%c0_28, %c0_29], %44 {strides = array<i32>} : memref<1x128xf32, #tpu.memory_space<vmem>>, vector<1x128xf32>,
      %c0_30 = arith.constant 0 : index
      %c0_31 = arith.constant 0 : index
      %46 = vector.load %arg12[%c0_30, %c0_31] : memref<1x128xf32, #tpu.memory_space<vmem>>, vector<1x128xf32>
      %cst_32 = arith.constant dense<0.000000e+00> : vector<128xf32>
      %47 = vector.multi_reduction <add>, %40, %cst_32 [0] : vector<16x128xf32> to vector<128xf32>
      %48 = vector.shape_cast %47 : vector<128xf32> to vector<1x128xf32>
      %49 = arith.addf %46, %48 : vector<1x128xf32>
      %c0_33 = arith.constant 0 : index
      %c0_34 = arith.constant 0 : index
      %50 = vector.load %arg12[%c0_33, %c0_34] : memref<1x128xf32, #tpu.memory_space<vmem>>, vector<1x128xf32>
      tpu.vector_store %arg12[%c0_33, %c0_34], %49 {strides = array<i32>} : memref<1x128xf32, #tpu.memory_space<vmem>>, vector<1x128xf32>,
      %c0_i32_35 = arith.constant 0 : i32
      %51 = arith.cmpi eq, %arg1, %c0_i32_35 : i32
      %52 = arith.extui %51 : i1 to i32
      %c0_i32_36 = arith.constant 0 : i32
      %53 = arith.cmpi ne, %52, %c0_i32_36 : i32
      scf.if %53 {
        %c0_37 = arith.constant 0 : index
        %c0_38 = arith.constant 0 : index
        %54 = vector.load %arg11[%c0_37, %c0_38] : memref<1x128xf32, #tpu.memory_space<vmem>>, vector<1x128xf32>
        %cst_39 = arith.constant 1.562500e-02 : f32
        %55 = vector.broadcast %cst_39 : f32 to vector<1x128xf32>
        %56 = arith.mulf %54, %55 : vector<1x128xf32>
        %c0_40 = arith.constant 0 : index
        %c0_41 = arith.constant 0 : index
        %57 = vector.load %arg12[%c0_40, %c0_41] : memref<1x128xf32, #tpu.memory_space<vmem>>, vector<1x128xf32>
        %cst_42 = arith.constant 1.562500e-02 : f32
        %58 = vector.broadcast %cst_42 : f32 to vector<1x128xf32>
        %59 = arith.mulf %57, %58 : vector<1x128xf32>
        %60 = arith.mulf %56, %56 : vector<1x128xf32>
        %61 = arith.subf %59, %60 : vector<1x128xf32>
        %cst_43 = arith.constant 0.000000e+00 : f32
        %62 = vector.broadcast %cst_43 : f32 to vector<1x128xf32>
        %63 = arith.maximumf %61, %62 : vector<1x128xf32>
        %c0_44 = arith.constant 0 : index
        %c0_45 = arith.constant 0 : index
        %64 = vector.load %arg11[%c0_44, %c0_45] : memref<1x128xf32, #tpu.memory_space<vmem>>, vector<1x128xf32>
        tpu.vector_store %arg11[%c0_44, %c0_45], %56 {strides = array<i32>} : memref<1x128xf32, #tpu.memory_space<vmem>>, vector<1x128xf32>,
        %cst_46 = arith.constant 9.99999974E-6 : f32
        %65 = vector.broadcast %cst_46 : f32 to vector<1x128xf32>
        %66 = arith.addf %63, %65 : vector<1x128xf32>
        %67 = math.rsqrt %66 : vector<1x128xf32>
        %c0_47 = arith.constant 0 : index
        %c0_48 = arith.constant 0 : index
        %68 = vector.load %arg12[%c0_47, %c0_48] : memref<1x128xf32, #tpu.memory_space<vmem>>, vector<1x128xf32>
        tpu.vector_store %arg12[%c0_47, %c0_48], %67 {strides = array<i32>} : memref<1x128xf32, #tpu.memory_space<vmem>>, vector<1x128xf32>,
      } else {
      }
    } else {
    }
    %c2_i32 = arith.constant 2 : i32
    %10 = arith.cmpi eq, %arg0, %c2_i32 : i32
    %11 = arith.extui %10 : i1 to i32
    %c0_i32_6 = arith.constant 0 : i32
    %12 = arith.cmpi ne, %11, %c0_i32_6 : i32
    scf.if %12 {
      %c0_7 = arith.constant 0 : index
      %c0_8 = arith.constant 0 : index
      %13 = vector.load %arg4[%c0_7, %c0_8] : memref<128x128xbf16, #tpu.memory_space<vmem>>, vector<128x128xbf16>
      %cst = arith.constant dense<0.000000e+00> : vector<64x128xf32>
      %14 = tpu.matmul %1, %13, %cst {dimension_numbers = #tpu.dot_dimension_numbers<[1], [0], [0], [1], [0, 0, 1, 1], [], []>} : vector<64x128xbf16>, vector<128x128xbf16>, vector<64x128xf32> -> vector<64x128xf32>
      %c0_9 = arith.constant 0 : index
      %c0_10 = arith.constant 0 : index
      %15 = vector.load %arg5[%c0_9, %c0_10] : memref<1x128xf32, #tpu.memory_space<vmem>>, vector<1x128xf32>
      %16 = vector.broadcast %15 : vector<1x128xf32> to vector<64x128xf32>
      %17 = arith.addf %14, %16 : vector<64x128xf32>
      %c0_11 = arith.constant 0 : index
      %c0_12 = arith.constant 0 : index
      %18 = vector.load %arg9[%c0_11, %c0_12] : memref<1x128xf32, #tpu.memory_space<vmem>>, vector<1x128xf32>
      %19 = vector.broadcast %18 : vector<1x128xf32> to vector<64x128xf32>
      %20 = arith.subf %17, %19 : vector<64x128xf32>
      %c0_13 = arith.constant 0 : index
      %c0_14 = arith.constant 0 : index
      %21 = vector.load %arg10[%c0_13, %c0_14] : memref<1x128xf32, #tpu.memory_space<vmem>>, vector<1x128xf32>
      %22 = vector.broadcast %21 : vector<1x128xf32> to vector<64x128xf32>
      %23 = arith.mulf %20, %22 : vector<64x128xf32>
      %cst_15 = arith.constant 0.000000e+00 : f32
      %24 = vector.broadcast %cst_15 : f32 to vector<64x128xf32>
      %25 = arith.maximumf %23, %24 : vector<64x128xf32>
      %26 = arith.truncf %25 : vector<64x128xf32> to vector<64x128xbf16>
      %c0_16 = arith.constant 0 : index
      %c0_17 = arith.constant 0 : index
      %27 = vector.load %arg6[%c0_16, %c0_17] : memref<128x128xbf16, #tpu.memory_space<vmem>>, vector<128x128xbf16>
      %cst_18 = arith.constant dense<0.000000e+00> : vector<64x128xf32>
      %28 = tpu.matmul %26, %27, %cst_18 {dimension_numbers = #tpu.dot_dimension_numbers<[1], [0], [0], [1], [0, 0, 1, 1], [], []>} : vector<64x128xbf16>, vector<128x128xbf16>, vector<64x128xf32> -> vector<64x128xf32>
      %c0_19 = arith.constant 0 : index
      %c0_20 = arith.constant 0 : index
      %29 = vector.load %arg7[%c0_19, %c0_20] : memref<1x128xf32, #tpu.memory_space<vmem>>, vector<1x128xf32>
      %30 = vector.broadcast %29 : vector<1x128xf32> to vector<64x128xf32>
      %31 = arith.addf %28, %30 : vector<64x128xf32>
      %c0_21 = arith.constant 0 : index
      %c0_22 = arith.constant 0 : index
      %32 = vector.load %arg11[%c0_21, %c0_22] : memref<1x128xf32, #tpu.memory_space<vmem>>, vector<1x128xf32>
      %33 = vector.broadcast %32 : vector<1x128xf32> to vector<64x128xf32>
      %34 = arith.subf %31, %33 : vector<64x128xf32>
      %c0_23 = arith.constant 0 : index
      %c0_24 = arith.constant 0 : index
      %35 = vector.load %arg12[%c0_23, %c0_24] : memref<1x128xf32, #tpu.memory_space<vmem>>, vector<1x128xf32>
      %36 = vector.broadcast %35 : vector<1x128xf32> to vector<64x128xf32>
      %37 = arith.mulf %34, %36 : vector<64x128xf32>
      %cst_25 = arith.constant 0.000000e+00 : f32
      %38 = vector.broadcast %cst_25 : f32 to vector<64x128xf32>
      %39 = arith.maximumf %37, %38 : vector<64x128xf32>
      %40 = vector.shape_cast %39 : vector<64x128xf32> to vector<4x16x128xf32>
      %cst_26 = arith.constant dense<0xFF800000> : vector<16x128xf32>
      %41 = vector.multi_reduction <maximumf>, %40, %cst_26 [0] : vector<4x16x128xf32> to vector<16x128xf32>
      %c0_27 = arith.constant 0 : index
      %c0_28 = arith.constant 0 : index
      %42 = vector.load %arg8[%c0_27, %c0_28] : memref<16x128xf32, #tpu.memory_space<vmem>>, vector<16x128xf32>
      tpu.vector_store %arg8[%c0_27, %c0_28], %41 {strides = array<i32>} : memref<16x128xf32, #tpu.memory_space<vmem>>, vector<16x128xf32>,
    } else {
    }
    return
  }
  func.func @transform_0(%arg0: i32, %arg1: i32) -> (i32, i32) {
    %c0_i32 = arith.constant 0 : i32
    %c0_i32_0 = arith.constant 0 : i32
    return %arg1, %c0_i32 : i32, i32
  }
  func.func @transform_1(%arg0: i32, %arg1: i32) -> (i32, i32, i32) {
    %c0_i32 = arith.constant 0 : i32
    %c0_i32_0 = arith.constant 0 : i32
    %c0_i32_1 = arith.constant 0 : i32
    return %c0_i32, %arg1, %c0_i32_0 : i32, i32, i32
  }
  func.func @transform_2(%arg0: i32, %arg1: i32) -> (i32, i32) {
    %c0_i32 = arith.constant 0 : i32
    %c0_i32_0 = arith.constant 0 : i32
    %c0_i32_1 = arith.constant 0 : i32
    return %c0_i32, %c0_i32_0 : i32, i32
  }
  func.func @transform_3(%arg0: i32, %arg1: i32) -> (i32, i32) {
    %c0_i32 = arith.constant 0 : i32
    %c0_i32_0 = arith.constant 0 : i32
    %c0_i32_1 = arith.constant 0 : i32
    return %c0_i32, %c0_i32_0 : i32, i32
  }
  func.func @transform_4(%arg0: i32, %arg1: i32) -> (i32, i32) {
    %c0_i32 = arith.constant 0 : i32
    %c0_i32_0 = arith.constant 0 : i32
    %c0_i32_1 = arith.constant 0 : i32
    return %c0_i32, %c0_i32_0 : i32, i32
  }
  func.func @transform_5(%arg0: i32, %arg1: i32) -> (i32, i32) {
    %c0_i32 = arith.constant 0 : i32
    %c0_i32_0 = arith.constant 0 : i32
    %c0_i32_1 = arith.constant 0 : i32
    return %c0_i32, %c0_i32_0 : i32, i32
  }
  func.func @transform_6(%arg0: i32, %arg1: i32) -> (i32, i32) {
    %c0_i32 = arith.constant 0 : i32
    %c0_i32_0 = arith.constant 0 : i32
    return %arg1, %c0_i32 : i32, i32
  }
}

</mosaic_0001>

<llo_original>
// kernel: tpu_custom_call.1
$region0: #{tpu_custom_call.1}
  #allocation0 [shape = 'u32[]', space=smem, size = 0x4, offset = 0x4, fixed_abs, tag = 'smem constant byte address 0x4 - core index']
  #allocation1 [shape = 'u32[144,128]{1,0:T(1,128)}', space=vmem, size = 0x12000, scoped, tag = 'internal scratch']
  #allocation2 [shape = 'f32[1,128]{1,0:T(1,128)}', space=vmem, size = 0x200, scoped, tag = 'scratch operand']
  #allocation3 [shape = 'f32[1,128]{1,0:T(1,128)}', space=vmem, size = 0x200, scoped, tag = 'scratch operand']
  #allocation4 [shape = 'f32[1,128]{1,0:T(1,128)}', space=vmem, size = 0x200, scoped, tag = 'scratch operand']
  #allocation5 [shape = 'f32[1,128]{1,0:T(1,128)}', space=vmem, size = 0x200, scoped, tag = 'scratch operand']
  %s0 = inlined_call_operand.vmem [shape: f32[16,1], index: 0, kind: input, shape index: {}]
  %s1 = inlined_call_operand.hbm [shape: bf16[4,16,128], index: 1, kind: input, shape index: {}]
  %s2 = inlined_call_operand.hbm [shape: bf16[128,128], index: 2, kind: input, shape index: {}]
  %s3 = inlined_call_operand.vmem [shape: f32[1,128], index: 3, kind: input, shape index: {}]
  %s4 = inlined_call_operand.hbm [shape: bf16[128,128], index: 4, kind: input, shape index: {}]
  %s5 = inlined_call_operand.vmem [shape: f32[1,128], index: 5, kind: input, shape index: {}]
  %s6 = inlined_call_operand.hbm [shape: f32[16,128], index: 6, kind: output, shape index: {}]
  %s7 = sld [smem:[#allocation0]]
  $region97: #{tpu_custom_call.1} parent=0
    _
  %s9 = ssub.s32 1, %s7
  %s10 = scalar_select 0, %s9, %s7
  $region1: #{tpu_custom_call.1} parent=0
    #allocation6 [shape = 'u8[16384]{0}', space=vmem, size = 0x4000, scoped, tag = 'input window, operand 1, single buffered']
    #allocation7 [shape = 's32[2]{0}', space=sflag, size = 0x8, scoped, tag = 'scoped memory for tpu_custom_call.1']
    #allocation8 [shape = 's32[2]{0}', space=sflag, size = 0x8, scoped, tag = 'scoped memory for tpu_custom_call.1']
    #allocation9 [shape = 'u8[32768]{0}', space=vmem, size = 0x8000, scoped, tag = 'input window, operand 2, single buffered']
    #allocation10 [shape = 's32[1]{0}', space=sflag, size = 0x4, scoped, tag = 'scoped memory for tpu_custom_call.1']
    #allocation11 [shape = 'u8[32768]{0}', space=vmem, size = 0x8000, scoped, tag = 'input window, operand 4, single buffered']
    #allocation12 [shape = 'u8[8192]{0}', space=vmem, size = 0x2000, scoped, tag = 'output window, operand 0, single buffered']
    %11 = vsyncpa [#allocation7], 0
    %12 = vsyncpa [#allocation10], 0
    %13 = vsyncpa [#allocation8], 0
    loop: start=0, step=1, limit=5
    $region2: #{tpu_custom_call.1} parent=1 // loop_pre_header
      _
    $region3: #{tpu_custom_call.1} parent=1 // loop_header
      %s15 = sphi 0, %s19
      %p16 = scmp.ge.s32.totalorder %s15, 5
      %s22 = sphi 0, %s34
      %s23 = sphi 0, %s30
      %s24 = sphi 0, %s22
      %s25 = sphi 0, %s23
      %s26 = sphi 0, %s24
      %s27 = sphi 0, %s25
      %s37 = sphi 0, %s39
      %s40 = sphi 0, %s37
      %s41 = sphi 0, %s40
      %s57 = sphi 0, %s41
      %s63 = sphi 0, %s65
      %s66 = sphi 0, %s63
      %s67 = sphi 0, %s66
      %s83 = sphi 0, %s67
      %s87 = sphi 0, %s87
      %s89 = sphi 0, %s87
      %s90 = sphi 0, %s89
      %s104 = sphi 0, %s90
      %s108 = sphi 0, %s108
      %s110 = sphi 0, %s108
      %s111 = sphi 0, %s110
      %s125 = sphi 0, %s111
      %s129 = sphi 0, %s129
      %s131 = sphi 0, %s129
      %s132 = sphi 0, %s131
      %s146 = sphi 0, %s132
      %s150 = sphi 0, %s150
      %s152 = sphi 0, %s150
      %s153 = sphi 0, %s152
      %s167 = sphi 0, %s153
      %s173 = sphi 0, %s175
      %s176 = sphi 0, %s173
      %s177 = sphi 0, %s176
      %s193 = sphi 0, %s177
    $region4: #{tpu_custom_call.1} parent=1 // loop_header_branch
      %18 = sbr.rel (%p16) target = $region8
    $region5: #{tpu_custom_call.1} parent=1 // loop_body
      %s20 = ssub.s32 %s15, 1
      %s21 = ssub.s32 %s15, 2
      %s28 = sadd.s32 1, %s23
      %p29 = scmp.ge.s32.totalorder %s28, 1
      %s30 = scalar_select %p29, 0, %s28
      %s31 = sadd.s32 1, %s22
      %s32 = scalar_select %p29, %s31, %s22
      %p33 = scmp.ge.s32.totalorder %s32, 3
      %s34 = scalar_select %p33, 0, %s32
      %s35 = ssub.s32 %s23, %s30
      %p36 = scmp.eq.s32.totalorder %s35, 0
      %s38 = sadd.s32 %s37, 1
      %s39 = scalar_select %p36, %s37, %s38
      %p42 = pneg %p36
      %p43 = scmp.eq.s32.totalorder %s15, 2
      %p44 = por %p42, %p43
      %p45 = scmp.ne.s32.totalorder %s37, %s40
      %p46 = scmp.eq.s32.totalorder %s15, 0
      %p47 = por %p45, %p46
      %p48 = scmp.ne.s32.totalorder %s37, %s40
      %p49 = scmp.eq.s32.totalorder %s20, 2
      %p50 = por %p48, %p49
      %p51 = scmp.ne.s32.totalorder %s40, %s41
      %p52 = scmp.eq.s32.totalorder %s20, 0
      %p53 = por %p51, %p52
      %p54 = scmp.ne.s32.totalorder %s40, %s41
      %p55 = scmp.eq.s32.totalorder %s21, 2
      %p56 = por %p54, %p55
      %p58 = scmp.ne.s32.totalorder %s41, %s57
      %p59 = scmp.eq.s32.totalorder %s21, 0
      %p60 = por %p58, %p59
      %s61 = ssub.s32 %s23, %s30
      %p62 = scmp.eq.s32.totalorder %s61, 0
      %s64 = sadd.s32 %s63, 1
      %s65 = scalar_select %p62, %s63, %s64
      %p68 = pneg %p62
      %p69 = scmp.eq.s32.totalorder %s15, 2
      %p70 = por %p68, %p69
      %p71 = scmp.ne.s32.totalorder %s63, %s66
      %p72 = scmp.eq.s32.totalorder %s15, 0
      %p73 = por %p71, %p72
      %p74 = scmp.ne.s32.totalorder %s63, %s66
      %p75 = scmp.eq.s32.totalorder %s20, 2
      %p76 = por %p74, %p75
      %p77 = scmp.ne.s32.totalorder %s66, %s67
      %p78 = scmp.eq.s32.totalorder %s20, 0
      %p79 = por %p77, %p78
      %p80 = scmp.ne.s32.totalorder %s66, %s67
      %p81 = scmp.eq.s32.totalorder %s21, 2
      %p82 = por %p80, %p81
      %p84 = scmp.ne.s32.totalorder %s67, %s83
      %p85 = scmp.eq.s32.totalorder %s21, 0
      %p86 = por %p84, %p85
      %s88 = sadd.s32 %s87, 1
      %p91 = scmp.eq.s32.totalorder %s15, 2
      %p92 = scmp.ne.s32.totalorder %s87, %s89
      %p93 = scmp.eq.s32.totalorder %s15, 0
      %p94 = por %p92, %p93
      %p95 = scmp.ne.s32.totalorder %s87, %s89
      %p96 = scmp.eq.s32.totalorder %s20, 2
      %p97 = por %p95, %p96
      %p98 = scmp.ne.s32.totalorder %s89, %s90
      %p99 = scmp.eq.s32.totalorder %s20, 0
      %p100 = por %p98, %p99
      %p101 = scmp.ne.s32.totalorder %s89, %s90
      %p102 = scmp.eq.s32.totalorder %s21, 2
      %p103 = por %p101, %p102
      %p105 = scmp.ne.s32.totalorder %s90, %s104
      %p106 = scmp.eq.s32.totalorder %s21, 0
      %p107 = por %p105, %p106
      %s109 = sadd.s32 %s108, 1
      %p112 = scmp.eq.s32.totalorder %s15, 2
      %p113 = scmp.ne.s32.totalorder %s108, %s110
      %p114 = scmp.eq.s32.totalorder %s15, 0
      %p115 = por %p113, %p114
      %p116 = scmp.ne.s32.totalorder %s108, %s110
      %p117 = scmp.eq.s32.totalorder %s20, 2
      %p118 = por %p116, %p117
      %p119 = scmp.ne.s32.totalorder %s110, %s111
      %p120 = scmp.eq.s32.totalorder %s20, 0
      %p121 = por %p119, %p120
      %p122 = scmp.ne.s32.totalorder %s110, %s111
      %p123 = scmp.eq.s32.totalorder %s21, 2
      %p124 = por %p122, %p123
      %p126 = scmp.ne.s32.totalorder %s111, %s125
      %p127 = scmp.eq.s32.totalorder %s21, 0
      %p128 = por %p126, %p127
      %s130 = sadd.s32 %s129, 1
      %p133 = scmp.eq.s32.totalorder %s15, 2
      %p134 = scmp.ne.s32.totalorder %s129, %s131
      %p135 = scmp.eq.s32.totalorder %s15, 0
      %p136 = por %p134, %p135
      %p137 = scmp.ne.s32.totalorder %s129, %s131
      %p138 = scmp.eq.s32.totalorder %s20, 2
      %p139 = por %p137, %p138
      %p140 = scmp.ne.s32.totalorder %s131, %s132
      %p141 = scmp.eq.s32.totalorder %s20, 0
      %p142 = por %p140, %p141
      %p143 = scmp.ne.s32.totalorder %s131, %s132
      %p144 = scmp.eq.s32.totalorder %s21, 2
      %p145 = por %p143, %p144
      %p147 = scmp.ne.s32.totalorder %s132, %s146
      %p148 = scmp.eq.s32.totalorder %s21, 0
      %p149 = por %p147, %p148
      %s151 = sadd.s32 %s150, 1
      %p154 = scmp.eq.s32.totalorder %s15, 2
      %p155 = scmp.ne.s32.totalorder %s150, %s152
      %p156 = scmp.eq.s32.totalorder %s15, 0
      %p157 = por %p155, %p156
      %p158 = scmp.ne.s32.totalorder %s150, %s152
      %p159 = scmp.eq.s32.totalorder %s20, 2
      %p160 = por %p158, %p159
      %p161 = scmp.ne.s32.totalorder %s152, %s153
      %p162 = scmp.eq.s32.totalorder %s20, 0
      %p163 = por %p161, %p162
      %p164 = scmp.ne.s32.totalorder %s152, %s153
      %p165 = scmp.eq.s32.totalorder %s21, 2
      %p166 = por %p164, %p165
      %p168 = scmp.ne.s32.totalorder %s153, %s167
      %p169 = scmp.eq.s32.totalorder %s21, 0
      %p170 = por %p168, %p169
      %s171 = ssub.s32 %s23, %s30
      %p172 = scmp.eq.s32.totalorder %s171, 0
      %s174 = sadd.s32 %s173, 1
      %s175 = scalar_select %p172, %s173, %s174
      %p178 = pneg %p172
      %p179 = scmp.eq.s32.totalorder %s15, 2
      %p180 = por %p178, %p179
      %p181 = scmp.ne.s32.totalorder %s173, %s176
      %p182 = scmp.eq.s32.totalorder %s15, 0
      %p183 = por %p181, %p182
      %p184 = scmp.ne.s32.totalorder %s173, %s176
      %p185 = scmp.eq.s32.totalorder %s20, 2
      %p186 = por %p184, %p185
      %p187 = scmp.ne.s32.totalorder %s176, %s177
      %p188 = scmp.eq.s32.totalorder %s20, 0
      %p189 = por %p187, %p188
      %p190 = scmp.ne.s32.totalorder %s176, %s177
      %p191 = scmp.eq.s32.totalorder %s21, 2
      %p192 = por %p190, %p191
      %p194 = scmp.ne.s32.totalorder %s177, %s193
      %p195 = scmp.eq.s32.totalorder %s21, 0
      %p196 = por %p194, %p195
      %p197 = scmp.le.s32.totalorder 1, %s15
      %p198 = scmp.lt.s32.totalorder %s15, 4
      %p199 = pnand %p197, %p198
      %p200 = pneg %p199
      // Predicated region
      $region9: #{tpu_custom_call.1} parent=5 // pred_check
        _
      $region10: #{tpu_custom_call.1} parent=5 // pred_check_branch
        %202 = sbr.rel (%p199) target = $region12
      $region11: #{tpu_custom_call.1} parent=5 // pred_region
        %s203 = ssub.s32 %s15, 1
        // Predicated region
        $region13: #{tpu_custom_call.1} parent=11 // pred_check
          %p204 = pneg %p53
        $region14: #{tpu_custom_call.1} parent=11 // pred_check_branch
          %206 = sbr.rel (%p204) target = $region16
        $region15: #{tpu_custom_call.1} parent=11 // pred_region
          %s207 = smul.u32 2, %s25
          %p208 = scmp.lt.s32.totalorder %s207, 1
          %s209 = scalar_select %p208, %s207, 1
          %s210 = smul.addr %s209, 8
          %s211 = scalar_lea.vmem %s0, %s210
          %s212 = smul.u32 2, %s25
        $region16: #{tpu_custom_call.1} parent=11 // pred_fallthru
          _
        // Predicated region
        $region17: #{tpu_custom_call.1} parent=11 // pred_check
          %p213 = pneg %p79
        $region18: #{tpu_custom_call.1} parent=11 // pred_check_branch
          %215 = sbr.rel (%p213) target = $region20
        $region19: #{tpu_custom_call.1} parent=11 // pred_region
          %s216 = smul.u32 2, %s25
          %s218 = ssub.s32 512, 512
          %219 = vsyncadd [#allocation7], %s218
          %s220 = smul.addr %s216, 64
          %s221 = scalar_lea.hbm %s1, %s220
          %s222 = sshll.u32 [#allocation6], 4
          %s223 = int_to_ptr.vmem [resolvable:$true] %s222
          %228 = dma.hbm_to_vmem [thread:$0]  %s221, 512, %s223, [#allocation7], 64, 64, 4
        $region20: #{tpu_custom_call.1} parent=11 // pred_fallthru
          _
        // Predicated region
        $region21: #{tpu_custom_call.1} parent=11 // pred_check
          %p229 = pneg %p100
        $region22: #{tpu_custom_call.1} parent=11 // pred_check_branch
          %231 = sbr.rel (%p229) target = $region24
        $region23: #{tpu_custom_call.1} parent=11 // pred_region
          %s233 = ssub.s32 1024, 1024
          %234 = vsyncadd [#allocation10], %s233
          %s235 = sshll.u32 [#allocation9], 4
          %s236 = int_to_ptr.vmem [resolvable:$true] %s235
          %241 = dma.hbm_to_vmem [thread:$0]  %s2, 1024, %s236, [#allocation10], 64, 64, 4
        $region24: #{tpu_custom_call.1} parent=11 // pred_fallthru
          _
        // Predicated region
        $region25: #{tpu_custom_call.1} parent=11 // pred_check
          %p242 = pneg %p121
        $region26: #{tpu_custom_call.1} parent=11 // pred_check_branch
          %244 = sbr.rel (%p242) target = $region28
        $region27: #{tpu_custom_call.1} parent=11 // pred_region
          _
        $region28: #{tpu_custom_call.1} parent=11 // pred_fallthru
          _
        // Predicated region
        $region29: #{tpu_custom_call.1} parent=11 // pred_check
          %p245 = pneg %p142
        $region30: #{tpu_custom_call.1} parent=11 // pred_check_branch
          %247 = sbr.rel (%p245) target = $region32
        $region31: #{tpu_custom_call.1} parent=11 // pred_region
          %s249 = ssub.s32 1024, 1024
          %250 = vsyncadd [#allocation10], %s249
          %s251 = sshll.u32 [#allocation11], 4
          %s252 = int_to_ptr.vmem [resolvable:$true] %s251
          %257 = dma.hbm_to_vmem [thread:$0]  %s4, 1024, %s252, [#allocation10], 64, 64, 4
        $region32: #{tpu_custom_call.1} parent=11 // pred_fallthru
          _
        // Predicated region
        $region33: #{tpu_custom_call.1} parent=11 // pred_check
          %p258 = pneg %p163
        $region34: #{tpu_custom_call.1} parent=11 // pred_check_branch
          %260 = sbr.rel (%p258) target = $region36
        $region35: #{tpu_custom_call.1} parent=11 // pred_region
          _
        $region36: #{tpu_custom_call.1} parent=11 // pred_fallthru
          _
      $region12: #{tpu_custom_call.1} parent=5 // pred_fallthru
        _
      %p261 = scmp.lt.s32.totalorder %s15, 3
      // Predicated region
      $region37: #{tpu_custom_call.1} parent=5 // pred_check
        %p262 = pneg %p261
      $region38: #{tpu_custom_call.1} parent=5 // pred_check_branch
        %264 = sbr.rel (%p262) target = $region40
      $region39: #{tpu_custom_call.1} parent=5 // pred_region
        _
      $region40: #{tpu_custom_call.1} parent=5 // pred_fallthru
        _
      %p265 = scmp.le.s32.totalorder 1, %s15
      %p266 = scmp.lt.s32.totalorder %s15, 4
      %p267 = pnand %p265, %p266
      %p268 = pneg %p267
      // Predicated region
      $region41: #{tpu_custom_call.1} parent=5 // pred_check
        _
      $region42: #{tpu_custom_call.1} parent=5 // pred_check_branch
        %270 = sbr.rel (%p267) target = $region44
      $region43: #{tpu_custom_call.1} parent=5 // pred_region
        %s271 = ssub.s32 %s15, 1
        // Predicated region
        $region45: #{tpu_custom_call.1} parent=43 // pred_check
          %p272 = pneg %p79
        $region46: #{tpu_custom_call.1} parent=43 // pred_check_branch
          %274 = sbr.rel (%p272) target = $region48
        $region47: #{tpu_custom_call.1} parent=43 // pred_region
          %275 = dma.done [#allocation7], 512
        $region48: #{tpu_custom_call.1} parent=43 // pred_fallthru
          _
        // Predicated region
        $region49: #{tpu_custom_call.1} parent=43 // pred_check
          %p276 = pneg %p100
        $region50: #{tpu_custom_call.1} parent=43 // pred_check_branch
          %278 = sbr.rel (%p276) target = $region52
        $region51: #{tpu_custom_call.1} parent=43 // pred_region
          %279 = dma.done [#allocation10], 1024
        $region52: #{tpu_custom_call.1} parent=43 // pred_fallthru
          _
        // Predicated region
        $region53: #{tpu_custom_call.1} parent=43 // pred_check
          %p280 = pneg %p142
        $region54: #{tpu_custom_call.1} parent=43 // pred_check_branch
          %282 = sbr.rel (%p280) target = $region56
        $region55: #{tpu_custom_call.1} parent=43 // pred_region
          %283 = dma.done [#allocation10], 1024
        $region56: #{tpu_custom_call.1} parent=43 // pred_fallthru
          _
        %s284 = smul.u32 2, %s25
        %p285 = scmp.lt.s32.totalorder %s284, 1
        %s286 = scalar_select %p285, %s284, 1
        %s287 = smul.addr %s286, 8
        %s288 = scalar_lea.vmem %s0, %s287
        %p289 = pneg %p53
        %p290 = pneg %p50
        %p291 = pneg %p79
        %p292 = pneg %p76
        %p293 = pneg %p100
        %p294 = pneg %p97
        %p295 = pneg %p121
        %p296 = pneg %p118
        %p297 = pneg %p142
        %p298 = pneg %p139
        %p299 = pneg %p163
        %p300 = pneg %p160
        %p301 = pneg %p189
        %p302 = pneg %p186
        %s303 = smul.u32 2, %s25
        %p304 = scmp.lt.s32.totalorder %s303, 1
        %s305 = scalar_select %p304, %s303, 1
        %s306 = smul.addr %s305, 8
        %s307 = scalar_lea.vmem %s0, %s306
        %s308 = smul.u32 2, %s25
        %s309 = smul.u32 2, %s25
        %s310 = smul.u32 2, %s25
        %v312 = vld [vmem:[#allocation6] sm:$0xf]
        %v313 = vld [vmem:[#allocation6 + $0x4] sm:$0xf]
        %v314 = vld [vmem:[#allocation6 + $0x8] sm:$0xf]
        %v315 = vld [vmem:[#allocation6 + $0xc] sm:$0xf]
        %v316 = vld [vmem:[#allocation6 + $0x10] sm:$0xf]
        %v317 = vld [vmem:[#allocation6 + $0x14] sm:$0xf]
        %v318 = vld [vmem:[#allocation6 + $0x18] sm:$0xf]
        %v319 = vld [vmem:[#allocation6 + $0x1c] sm:$0xf]
        %v320 = vld [vmem:[%s307] sm:$0xff]
        %v321 = vld [vmem:[%s307 + $0x8] sm:$0xff]
        %p322 = scmp.eq.s32.totalorder %s24, 0
        // Predicated region
        $region57: #{tpu_custom_call.1} parent=43 // pred_check
          %p323 = pneg %p322
        $region58: #{tpu_custom_call.1} parent=43 // pred_check_branch
          %325 = sbr.rel (%p323) target = $region60
        $region59: #{tpu_custom_call.1} parent=43 // pred_region
          %p326 = scmp.eq.s32.totalorder %s25, 0
          // Predicated region
          $region61: #{tpu_custom_call.1} parent=59 // pred_check
            %p327 = pneg %p326
          $region62: #{tpu_custom_call.1} parent=59 // pred_check_branch
            %329 = sbr.rel (%p327) target = $region64
          $region63: #{tpu_custom_call.1} parent=59 // pred_region
            %330 = vst [vmem:[#allocation2] sm:$0x1] 0.0
            %331 = vst [vmem:[#allocation3] sm:$0x1] 0.0
          $region64: #{tpu_custom_call.1} parent=59 // pred_fallthru
            _
          %v332 = vld [vmem:[#allocation9] sm:$0xf]
          %v333 = vld [vmem:[#allocation9 + $0x4] sm:$0xf]
          %v334 = vld [vmem:[#allocation9 + $0x8] sm:$0xf]
          %v335 = vld [vmem:[#allocation9 + $0xc] sm:$0xf]
          %v336 = vld [vmem:[#allocation9 + $0x10] sm:$0xf]
          %v337 = vld [vmem:[#allocation9 + $0x14] sm:$0xf]
          %v338 = vld [vmem:[#allocation9 + $0x18] sm:$0xf]
          %v339 = vld [vmem:[#allocation9 + $0x1c] sm:$0xf]
          %v340 = vld [vmem:[#allocation9 + $0x20] sm:$0xf]
          %v341 = vld [vmem:[#allocation9 + $0x24] sm:$0xf]
          %v342 = vld [vmem:[#allocation9 + $0x28] sm:$0xf]
          %v343 = vld [vmem:[#allocation9 + $0x2c] sm:$0xf]
          %v344 = vld [vmem:[#allocation9 + $0x30] sm:$0xf]
          %v345 = vld [vmem:[#allocation9 + $0x34] sm:$0xf]
          %v346 = vld [vmem:[#allocation9 + $0x38] sm:$0xf]
          %v347 = vld [vmem:[#allocation9 + $0x3c] sm:$0xf]
          %v348 = vld [vmem:[%s3] sm:$0x1]
          %v350 = vlaneseq
          %v351 = vshrl.u32 %v350, 7
          %v352 = vsub.s32 0, %v351
          %v353 = vrot.slane %v348, %v352
          %v363 = vunpack.c.l.b16 %v312
          %v364 = vunpack.c.l.b16 %v313
          %v365 = vunpack.c.l.b16 %v314
          %v366 = vunpack.c.l.b16 %v315
          %v367 = vunpack.c.l.b16 %v316
          %v368 = vunpack.c.l.b16 %v317
          %v369 = vunpack.c.l.b16 %v318
          %v370 = vunpack.c.l.b16 %v319
          %v371 = vpack.c.b16 %v364, %v363
          %v372 = vpack.c.b16 %v366, %v365
          %v373 = vpack.c.b16 %v368, %v367
          %v374 = vpack.c.b16 %v370, %v369
          %v395 = vunpack.c.l.b16 %v332
          %v396 = vunpack.c.l.b16 %v333
          %v397 = vunpack.c.l.b16 %v334
          %v398 = vunpack.c.l.b16 %v335
          %v399 = vunpack.c.l.b16 %v336
          %v400 = vunpack.c.l.b16 %v337
          %v401 = vunpack.c.l.b16 %v338
          %v402 = vunpack.c.l.b16 %v339
          %v403 = vunpack.c.l.b16 %v340
          %v404 = vunpack.c.l.b16 %v341
          %v405 = vunpack.c.l.b16 %v342
          %v406 = vunpack.c.l.b16 %v343
          %v407 = vunpack.c.l.b16 %v344
          %v408 = vunpack.c.l.b16 %v345
          %v409 = vunpack.c.l.b16 %v346
          %v410 = vunpack.c.l.b16 %v347
          %v411 = vpack.c.b16 %v396, %v395
          %v412 = vpack.c.b16 %v398, %v397
          %v413 = vpack.c.b16 %v400, %v399
          %v414 = vpack.c.b16 %v402, %v401
          %v415 = vpack.c.b16 %v404, %v403
          %v416 = vpack.c.b16 %v406, %v405
          %v417 = vpack.c.b16 %v408, %v407
          %v418 = vpack.c.b16 %v410, %v409
          %427 = vmatprep.subr.bf16.mxu0 0
          %428 = vmatpush1.bf16.msra.mxu0 %v418
          %429 = vmatprep.subr.bf16.mxu0 0
          %430 = vmatpush1.bf16.msra.mxu0 %v417
          %431 = vmatprep.subr.bf16.mxu0 0
          %432 = vmatpush1.bf16.msra.mxu0 %v416
          %433 = vmatprep.subr.bf16.mxu0 0
          %434 = vmatpush1.bf16.msra.mxu0 %v415
          %435 = vmatprep.subr.bf16.mxu0 0
          %436 = vmatpush1.bf16.msra.mxu0 %v414
          %437 = vmatprep.subr.bf16.mxu0 0
          %438 = vmatpush1.bf16.msra.mxu0 %v413
          %439 = vmatprep.subr.bf16.mxu0 0
          %440 = vmatpush1.bf16.msra.mxu0 %v412
          %441 = vmatprep.subr.bf16.mxu0 0
          %442 = vmatpush1.bf16.msra.mxu0 %v411
          %443 = vmatprep.subr.bf16.mxu0 0
          %444 = vmatpush2.bf16.msra.mxu0 0
          %445 = vmatprep.subr.bf16.mxu0 0
          %446 = vmatpush2.bf16.msra.mxu0 0
          %447 = vmatprep.subr.bf16.mxu0 0
          %448 = vmatpush2.bf16.msra.mxu0 0
          %449 = vmatprep.subr.bf16.mxu0 0
          %450 = vmatpush2.bf16.msra.mxu0 0
          %451 = vmatprep.subr.bf16.mxu0 0
          %452 = vmatpush2.bf16.msra.mxu0 0
          %453 = vmatprep.subr.bf16.mxu0 0
          %454 = vmatpush2.bf16.msra.mxu0 0
          %455 = vmatprep.subr.bf16.mxu0 0
          %456 = vmatpush2.bf16.msra.mxu0 0
          %457 = vmatprep.subr.bf16.mxu0 0
          %458 = vmatpush2.bf16.msra.mxu0 0
          %459 = vmatprep.mubr.bf16.mxu0 0
          %460 = vmatmul.mubr.bf16.gmra.mxu0 %v371
          %v461 = vpop.f32.mrf.mxu0
          %v462 = vadd.f32 %v353, %v461
          %v463 = vpop.f32.mrf.mxu0
          %v464 = vpop.f32.mrf.mxu0
          %v465 = vadd.f32 %v353, %v464
          %v466 = vpop.f32.mrf.mxu0
          %467 = vmatprep.mubr.bf16.mxu0 0
          %468 = vmatmul.mubr.bf16.gmra.mxu0 %v372
          %v469 = vpop.f32.mrf.mxu0
          %v470 = vadd.f32 %v353, %v469
          %v471 = vpop.f32.mrf.mxu0
          %v472 = vpop.f32.mrf.mxu0
          %v473 = vadd.f32 %v353, %v472
          %v474 = vpop.f32.mrf.mxu0
          %475 = vmatprep.mubr.bf16.mxu0 0
          %476 = vmatmul.mubr.bf16.gmra.mxu0 %v373
          %v477 = vpop.f32.mrf.mxu0
          %v478 = vadd.f32 %v353, %v477
          %v479 = vpop.f32.mrf.mxu0
          %v480 = vpop.f32.mrf.mxu0
          %v481 = vadd.f32 %v353, %v480
          %v482 = vpop.f32.mrf.mxu0
          %483 = vmatprep.mubr.bf16.mxu0 0
          %484 = vmatmul.mubr.bf16.gmra.mxu0 %v374
          %v485 = vpop.f32.mrf.mxu0
          %v486 = vadd.f32 %v353, %v485
          %v487 = vpop.f32.mrf.mxu0
          %v488 = vpop.f32.mrf.mxu0
          %v489 = vadd.f32 %v353, %v488
          %v490 = vpop.f32.mrf.mxu0
          %491 = vdwg.mxu0
          %493 = vset.pattern.permute.xlu0 0
          %494 = vperm.xlu0 %493, %v320
          %v495 = vpop.permute.xlu0 %494
          %498 = vset.pattern.permute.xlu0 0
          %499 = vperm.xlu0 %498, %v321
          %v500 = vpop.permute.xlu0 %499
          %v502 = vmul.f32 %v462, %v495
          %v503 = vmul.f32 %v465, %v500
          %v504 = vmul.f32 %v470, %v495
          %v505 = vmul.f32 %v473, %v500
          %v506 = vmul.f32 %v478, %v495
          %v507 = vmul.f32 %v481, %v500
          %v508 = vmul.f32 %v486, %v495
          %v509 = vmul.f32 %v489, %v500
          %v510 = vadd.f32 %v502, %v504
          %v511 = vadd.f32 %v510, %v506
          %v512 = vadd.f32 %v511, %v508
          %v513 = vadd.f32 %v503, %v505
          %v514 = vadd.f32 %v513, %v507
          %v515 = vadd.f32 %v514, %v509
          %v516 = vmul.f32 %v502, %v502
          %v517 = vmul.f32 %v503, %v503
          %v518 = vmul.f32 %v504, %v504
          %v519 = vmul.f32 %v505, %v505
          %v520 = vmul.f32 %v506, %v506
          %v521 = vmul.f32 %v507, %v507
          %v522 = vmul.f32 %v508, %v508
          %v523 = vmul.f32 %v509, %v509
          %v524 = vadd.f32 %v516, %v518
          %v525 = vadd.f32 %v524, %v520
          %v526 = vadd.f32 %v525, %v522
          %v527 = vadd.f32 %v517, %v519
          %v528 = vadd.f32 %v527, %v521
          %v529 = vadd.f32 %v528, %v523
          %v530 = vld [vmem:[#allocation2] sm:$0x1]
          %v531 = vadd.f32 %v512, %v515
          %v532 = vrot.slane %v531, 4
          %v533 = vadd.f32 %v531, %v532
          %v534 = vrot.slane %v533, 2
          %v535 = vadd.f32 %v533, %v534
          %v536 = vrot.slane %v535, 1
          %v537 = vadd.f32 %v535, %v536
          %v538 = vadd.f32 %v530, %v537
          %539 = vst [vmem:[#allocation2] sm:$0x1] %v538
          %v540 = vld [vmem:[#allocation3] sm:$0x1]
          %v541 = vadd.f32 %v526, %v529
          %v542 = vrot.slane %v541, 4
          %v543 = vadd.f32 %v541, %v542
          %v544 = vrot.slane %v543, 2
          %v545 = vadd.f32 %v543, %v544
          %v546 = vrot.slane %v545, 1
          %v547 = vadd.f32 %v545, %v546
          %v548 = vadd.f32 %v540, %v547
          %549 = vst [vmem:[#allocation3] sm:$0x1] %v548
          // Predicated region
          $region65: #{tpu_custom_call.1} parent=59 // pred_check
            %p550 = pneg %p326
          $region66: #{tpu_custom_call.1} parent=59 // pred_check_branch
            %552 = sbr.rel (%p550) target = $region68
          $region67: #{tpu_custom_call.1} parent=59 // pred_region
            %v553 = vld [vmem:[#allocation2] sm:$0x1]
            %v554 = vmul.f32 %v553, 0.015625
            %v555 = vld [vmem:[#allocation3] sm:$0x1]
            %v556 = vmul.f32 %v555, 0.015625
            %v557 = vmul.f32 %v554, %v554
            %v558 = vsub.f32 %v556, %v557
            %v559 = vmax.f32 %v558, 0.0
            %560 = vst [vmem:[#allocation2] sm:$0x1] %v554
            %v561 = vadd.f32 %v559, 1e-05
            %v562 = vrsqrt.pop %v561
            %563 = vst [vmem:[#allocation3] sm:$0x1] %v562
          $region68: #{tpu_custom_call.1} parent=59 // pred_fallthru
            _
        $region60: #{tpu_custom_call.1} parent=43 // pred_fallthru
          _
        %p564 = scmp.eq.s32.totalorder %s24, 1
        // Predicated region
        $region69: #{tpu_custom_call.1} parent=43 // pred_check
          %p565 = pneg %p564
        $region70: #{tpu_custom_call.1} parent=43 // pred_check_branch
          %567 = sbr.rel (%p565) target = $region72
        $region71: #{tpu_custom_call.1} parent=43 // pred_region
          %p568 = scmp.eq.s32.totalorder %s25, 0
          // Predicated region
          $region73: #{tpu_custom_call.1} parent=71 // pred_check
            %p569 = pneg %p568
          $region74: #{tpu_custom_call.1} parent=71 // pred_check_branch
            %571 = sbr.rel (%p569) target = $region76
          $region75: #{tpu_custom_call.1} parent=71 // pred_region
            %572 = vst [vmem:[#allocation4] sm:$0x1] 0.0
            %573 = vst [vmem:[#allocation5] sm:$0x1] 0.0
          $region76: #{tpu_custom_call.1} parent=71 // pred_fallthru
            _
          %v574 = vld [vmem:[#allocation9] sm:$0xf]
          %v575 = vld [vmem:[#allocation9 + $0x4] sm:$0xf]
          %v576 = vld [vmem:[#allocation9 + $0x8] sm:$0xf]
          %v577 = vld [vmem:[#allocation9 + $0xc] sm:$0xf]
          %v578 = vld [vmem:[#allocation9 + $0x10] sm:$0xf]
          %v579 = vld [vmem:[#allocation9 + $0x14] sm:$0xf]
          %v580 = vld [vmem:[#allocation9 + $0x18] sm:$0xf]
          %v581 = vld [vmem:[#allocation9 + $0x1c] sm:$0xf]
          %v582 = vld [vmem:[#allocation9 + $0x20] sm:$0xf]
          %v583 = vld [vmem:[#allocation9 + $0x24] sm:$0xf]
          %v584 = vld [vmem:[#allocation9 + $0x28] sm:$0xf]
          %v585 = vld [vmem:[#allocation9 + $0x2c] sm:$0xf]
          %v586 = vld [vmem:[#allocation9 + $0x30] sm:$0xf]
          %v587 = vld [vmem:[#allocation9 + $0x34] sm:$0xf]
          %v588 = vld [vmem:[#allocation9 + $0x38] sm:$0xf]
          %v589 = vld [vmem:[#allocation9 + $0x3c] sm:$0xf]
          %v590 = vld [vmem:[%s3] sm:$0x1]
          %v592 = vlaneseq
          %v593 = vshrl.u32 %v592, 7
          %v594 = vsub.s32 0, %v593
          %v595 = vrot.slane %v590, %v594
          %v605 = vunpack.c.l.b16 %v312
          %v606 = vunpack.c.l.b16 %v313
          %v607 = vunpack.c.l.b16 %v314
          %v608 = vunpack.c.l.b16 %v315
          %v609 = vunpack.c.l.b16 %v316
          %v610 = vunpack.c.l.b16 %v317
          %v611 = vunpack.c.l.b16 %v318
          %v612 = vunpack.c.l.b16 %v319
          %v613 = vpack.c.b16 %v606, %v605
          %v614 = vpack.c.b16 %v608, %v607
          %v615 = vpack.c.b16 %v610, %v609
          %v616 = vpack.c.b16 %v612, %v611
          %v637 = vunpack.c.l.b16 %v574
          %v638 = vunpack.c.l.b16 %v575
          %v639 = vunpack.c.l.b16 %v576
          %v640 = vunpack.c.l.b16 %v577
          %v641 = vunpack.c.l.b16 %v578
          %v642 = vunpack.c.l.b16 %v579
          %v643 = vunpack.c.l.b16 %v580
          %v644 = vunpack.c.l.b16 %v581
          %v645 = vunpack.c.l.b16 %v582
          %v646 = vunpack.c.l.b16 %v583
          %v647 = vunpack.c.l.b16 %v584
          %v648 = vunpack.c.l.b16 %v585
          %v649 = vunpack.c.l.b16 %v586
          %v650 = vunpack.c.l.b16 %v587
          %v651 = vunpack.c.l.b16 %v588
          %v652 = vunpack.c.l.b16 %v589
          %v653 = vpack.c.b16 %v638, %v637
          %v654 = vpack.c.b16 %v640, %v639
          %v655 = vpack.c.b16 %v642, %v641
          %v656 = vpack.c.b16 %v644, %v643
          %v657 = vpack.c.b16 %v646, %v645
          %v658 = vpack.c.b16 %v648, %v647
          %v659 = vpack.c.b16 %v650, %v649
          %v660 = vpack.c.b16 %v652, %v651
          %669 = vmatprep.subr.bf16.mxu0 0
          %670 = vmatpush1.bf16.msra.mxu0 %v660
          %671 = vmatprep.subr.bf16.mxu0 0
          %672 = vmatpush1.bf16.msra.mxu0 %v659
          %673 = vmatprep.subr.bf16.mxu0 0
          %674 = vmatpush1.bf16.msra.mxu0 %v658
          %675 = vmatprep.subr.bf16.mxu0 0
          %676 = vmatpush1.bf16.msra.mxu0 %v657
          %677 = vmatprep.subr.bf16.mxu0 0
          %678 = vmatpush1.bf16.msra.mxu0 %v656
          %679 = vmatprep.subr.bf16.mxu0 0
          %680 = vmatpush1.bf16.msra.mxu0 %v655
          %681 = vmatprep.subr.bf16.mxu0 0
          %682 = vmatpush1.bf16.msra.mxu0 %v654
          %683 = vmatprep.subr.bf16.mxu0 0
          %684 = vmatpush1.bf16.msra.mxu0 %v653
          %685 = vmatprep.subr.bf16.mxu0 0
          %686 = vmatpush2.bf16.msra.mxu0 0
          %687 = vmatprep.subr.bf16.mxu0 0
          %688 = vmatpush2.bf16.msra.mxu0 0
          %689 = vmatprep.subr.bf16.mxu0 0
          %690 = vmatpush2.bf16.msra.mxu0 0
          %691 = vmatprep.subr.bf16.mxu0 0
          %692 = vmatpush2.bf16.msra.mxu0 0
          %693 = vmatprep.subr.bf16.mxu0 0
          %694 = vmatpush2.bf16.msra.mxu0 0
          %695 = vmatprep.subr.bf16.mxu0 0
          %696 = vmatpush2.bf16.msra.mxu0 0
          %697 = vmatprep.subr.bf16.mxu0 0
          %698 = vmatpush2.bf16.msra.mxu0 0
          %699 = vmatprep.subr.bf16.mxu0 0
          %700 = vmatpush2.bf16.msra.mxu0 0
          %701 = vmatprep.mubr.bf16.mxu0 0
          %702 = vmatmul.mubr.bf16.gmra.mxu0 %v613
          %v703 = vpop.f32.mrf.mxu0
          %v704 = vadd.f32 %v595, %v703
          %v705 = vpop.f32.mrf.mxu0
          %v706 = vpop.f32.mrf.mxu0
          %v707 = vadd.f32 %v595, %v706
          %v708 = vpop.f32.mrf.mxu0
          %709 = vmatprep.mubr.bf16.mxu0 0
          %710 = vmatmul.mubr.bf16.gmra.mxu0 %v614
          %v711 = vpop.f32.mrf.mxu0
          %v712 = vadd.f32 %v595, %v711
          %v713 = vpop.f32.mrf.mxu0
          %v714 = vpop.f32.mrf.mxu0
          %v715 = vadd.f32 %v595, %v714
          %v716 = vpop.f32.mrf.mxu0
          %717 = vmatprep.mubr.bf16.mxu0 0
          %718 = vmatmul.mubr.bf16.gmra.mxu0 %v615
          %v719 = vpop.f32.mrf.mxu0
          %v720 = vadd.f32 %v595, %v719
          %v721 = vpop.f32.mrf.mxu0
          %v722 = vpop.f32.mrf.mxu0
          %v723 = vadd.f32 %v595, %v722
          %v724 = vpop.f32.mrf.mxu0
          %725 = vmatprep.mubr.bf16.mxu0 0
          %726 = vmatmul.mubr.bf16.gmra.mxu0 %v616
          %v727 = vpop.f32.mrf.mxu0
          %v728 = vadd.f32 %v595, %v727
          %v729 = vpop.f32.mrf.mxu0
          %v730 = vpop.f32.mrf.mxu0
          %v731 = vadd.f32 %v595, %v730
          %v732 = vpop.f32.mrf.mxu0
          %733 = vdwg.mxu0
          %v734 = vld [vmem:[#allocation2] sm:$0x1]
          %v736 = vlaneseq
          %v737 = vshrl.u32 %v736, 7
          %v738 = vsub.s32 0, %v737
          %v739 = vrot.slane %v734, %v738
          %v741 = vsub.f32 %v704, %v739
          %v742 = vsub.f32 %v707, %v739
          %v743 = vsub.f32 %v712, %v739
          %v744 = vsub.f32 %v715, %v739
          %v745 = vsub.f32 %v720, %v739
          %v746 = vsub.f32 %v723, %v739
          %v747 = vsub.f32 %v728, %v739
          %v748 = vsub.f32 %v731, %v739
          %v749 = vld [vmem:[#allocation3] sm:$0x1]
          %v751 = vlaneseq
          %v752 = vshrl.u32 %v751, 7
          %v753 = vsub.s32 0, %v752
          %v754 = vrot.slane %v749, %v753
          %v756 = vmul.f32 %v741, %v754
          %v757 = vmul.f32 %v742, %v754
          %v758 = vmul.f32 %v743, %v754
          %v759 = vmul.f32 %v744, %v754
          %v760 = vmul.f32 %v745, %v754
          %v761 = vmul.f32 %v746, %v754
          %v762 = vmul.f32 %v747, %v754
          %v763 = vmul.f32 %v748, %v754
          %v764 = vmax.f32 %v756, 0.0
          %v765 = vmax.f32 %v757, 0.0
          %v766 = vmax.f32 %v758, 0.0
          %v767 = vmax.f32 %v759, 0.0
          %v768 = vmax.f32 %v760, 0.0
          %v769 = vmax.f32 %v761, 0.0
          %v770 = vmax.f32 %v762, 0.0
          %v771 = vmax.f32 %v763, 0.0
          %v772 = vpack.c.bf16 %v765, %v764
          %v773 = vpack.c.bf16 %v767, %v766
          %v774 = vpack.c.bf16 %v769, %v768
          %v775 = vpack.c.bf16 %v771, %v770
          %v776 = vld [vmem:[#allocation11] sm:$0xf]
          %v777 = vld [vmem:[#allocation11 + $0x4] sm:$0xf]
          %v778 = vld [vmem:[#allocation11 + $0x8] sm:$0xf]
          %v779 = vld [vmem:[#allocation11 + $0xc] sm:$0xf]
          %v780 = vld [vmem:[#allocation11 + $0x10] sm:$0xf]
          %v781 = vld [vmem:[#allocation11 + $0x14] sm:$0xf]
          %v782 = vld [vmem:[#allocation11 + $0x18] sm:$0xf]
          %v783 = vld [vmem:[#allocation11 + $0x1c] sm:$0xf]
          %v784 = vld [vmem:[#allocation11 + $0x20] sm:$0xf]
          %v785 = vld [vmem:[#allocation11 + $0x24] sm:$0xf]
          %v786 = vld [vmem:[#allocation11 + $0x28] sm:$0xf]
          %v787 = vld [vmem:[#allocation11 + $0x2c] sm:$0xf]
          %v788 = vld [vmem:[#allocation11 + $0x30] sm:$0xf]
          %v789 = vld [vmem:[#allocation11 + $0x34] sm:$0xf]
          %v790 = vld [vmem:[#allocation11 + $0x38] sm:$0xf]
          %v791 = vld [vmem:[#allocation11 + $0x3c] sm:$0xf]
          %v792 = vld [vmem:[%s5] sm:$0x1]
          %v794 = vlaneseq
          %v795 = vshrl.u32 %v794, 7
          %v796 = vsub.s32 0, %v795
          %v797 = vrot.slane %v792, %v796
          %v815 = vunpack.c.l.b16 %v776
          %v816 = vunpack.c.l.b16 %v777
          %v817 = vunpack.c.l.b16 %v778
          %v818 = vunpack.c.l.b16 %v779
          %v819 = vunpack.c.l.b16 %v780
          %v820 = vunpack.c.l.b16 %v781
          %v821 = vunpack.c.l.b16 %v782
          %v822 = vunpack.c.l.b16 %v783
          %v823 = vunpack.c.l.b16 %v784
          %v824 = vunpack.c.l.b16 %v785
          %v825 = vunpack.c.l.b16 %v786
          %v826 = vunpack.c.l.b16 %v787
          %v827 = vunpack.c.l.b16 %v788
          %v828 = vunpack.c.l.b16 %v789
          %v829 = vunpack.c.l.b16 %v790
          %v830 = vunpack.c.l.b16 %v791
          %v831 = vpack.c.b16 %v816, %v815
          %v832 = vpack.c.b16 %v818, %v817
          %v833 = vpack.c.b16 %v820, %v819
          %v834 = vpack.c.b16 %v822, %v821
          %v835 = vpack.c.b16 %v824, %v823
          %v836 = vpack.c.b16 %v826, %v825
          %v837 = vpack.c.b16 %v828, %v827
          %v838 = vpack.c.b16 %v830, %v829
          %847 = vmatprep.subr.bf16.mxu0 0
          %848 = vmatpush1.bf16.msra.mxu0 %v838
          %849 = vmatprep.subr.bf16.mxu0 0
          %850 = vmatpush1.bf16.msra.mxu0 %v837
          %851 = vmatprep.subr.bf16.mxu0 0
          %852 = vmatpush1.bf16.msra.mxu0 %v836
          %853 = vmatprep.subr.bf16.mxu0 0
          %854 = vmatpush1.bf16.msra.mxu0 %v835
          %855 = vmatprep.subr.bf16.mxu0 0
          %856 = vmatpush1.bf16.msra.mxu0 %v834
          %857 = vmatprep.subr.bf16.mxu0 0
          %858 = vmatpush1.bf16.msra.mxu0 %v833
          %859 = vmatprep.subr.bf16.mxu0 0
          %860 = vmatpush1.bf16.msra.mxu0 %v832
          %861 = vmatprep.subr.bf16.mxu0 0
          %862 = vmatpush1.bf16.msra.mxu0 %v831
          %863 = vmatprep.subr.bf16.mxu0 0
          %864 = vmatpush2.bf16.msra.mxu0 0
          %865 = vmatprep.subr.bf16.mxu0 0
          %866 = vmatpush2.bf16.msra.mxu0 0
          %867 = vmatprep.subr.bf16.mxu0 0
          %868 = vmatpush2.bf16.msra.mxu0 0
          %869 = vmatprep.subr.bf16.mxu0 0
          %870 = vmatpush2.bf16.msra.mxu0 0
          %871 = vmatprep.subr.bf16.mxu0 0
          %872 = vmatpush2.bf16.msra.mxu0 0
          %873 = vmatprep.subr.bf16.mxu0 0
          %874 = vmatpush2.bf16.msra.mxu0 0
          %875 = vmatprep.subr.bf16.mxu0 0
          %876 = vmatpush2.bf16.msra.mxu0 0
          %877 = vmatprep.subr.bf16.mxu0 0
          %878 = vmatpush2.bf16.msra.mxu0 0
          %879 = vmatprep.mubr.bf16.mxu0 0
          %880 = vmatmul.mubr.bf16.gmra.mxu0 %v772
          %v881 = vpop.f32.mrf.mxu0
          %v882 = vadd.f32 %v797, %v881
          %v883 = vpop.f32.mrf.mxu0
          %v884 = vpop.f32.mrf.mxu0
          %v885 = vadd.f32 %v797, %v884
          %v886 = vpop.f32.mrf.mxu0
          %887 = vmatprep.mubr.bf16.mxu0 0
          %888 = vmatmul.mubr.bf16.gmra.mxu0 %v773
          %v889 = vpop.f32.mrf.mxu0
          %v890 = vadd.f32 %v797, %v889
          %v891 = vpop.f32.mrf.mxu0
          %v892 = vpop.f32.mrf.mxu0
          %v893 = vadd.f32 %v797, %v892
          %v894 = vpop.f32.mrf.mxu0
          %895 = vmatprep.mubr.bf16.mxu0 0
          %896 = vmatmul.mubr.bf16.gmra.mxu0 %v774
          %v897 = vpop.f32.mrf.mxu0
          %v898 = vadd.f32 %v797, %v897
          %v899 = vpop.f32.mrf.mxu0
          %v900 = vpop.f32.mrf.mxu0
          %v901 = vadd.f32 %v797, %v900
          %v902 = vpop.f32.mrf.mxu0
          %903 = vmatprep.mubr.bf16.mxu0 0
          %904 = vmatmul.mubr.bf16.gmra.mxu0 %v775
          %v905 = vpop.f32.mrf.mxu0
          %v906 = vadd.f32 %v797, %v905
          %v907 = vpop.f32.mrf.mxu0
          %v908 = vpop.f32.mrf.mxu0
          %v909 = vadd.f32 %v797, %v908
          %v910 = vpop.f32.mrf.mxu0
          %911 = vdwg.mxu0
          %913 = vset.pattern.permute.xlu0 0
          %914 = vperm.xlu0 %913, %v320
          %v915 = vpop.permute.xlu0 %914
          %918 = vset.pattern.permute.xlu0 0
          %919 = vperm.xlu0 %918, %v321
          %v920 = vpop.permute.xlu0 %919
          %v922 = vmul.f32 %v882, %v915
          %v923 = vmul.f32 %v885, %v920
          %v924 = vmul.f32 %v890, %v915
          %v925 = vmul.f32 %v893, %v920
          %v926 = vmul.f32 %v898, %v915
          %v927 = vmul.f32 %v901, %v920
          %v928 = vmul.f32 %v906, %v915
          %v929 = vmul.f32 %v909, %v920
          %v930 = vadd.f32 %v922, %v924
          %v931 = vadd.f32 %v930, %v926
          %v932 = vadd.f32 %v931, %v928
          %v933 = vadd.f32 %v923, %v925
          %v934 = vadd.f32 %v933, %v927
          %v935 = vadd.f32 %v934, %v929
          %v936 = vmul.f32 %v922, %v922
          %v937 = vmul.f32 %v923, %v923
          %v938 = vmul.f32 %v924, %v924
          %v939 = vmul.f32 %v925, %v925
          %v940 = vmul.f32 %v926, %v926
          %v941 = vmul.f32 %v927, %v927
          %v942 = vmul.f32 %v928, %v928
          %v943 = vmul.f32 %v929, %v929
          %v944 = vadd.f32 %v936, %v938
          %v945 = vadd.f32 %v944, %v940
          %v946 = vadd.f32 %v945, %v942
          %v947 = vadd.f32 %v937, %v939
          %v948 = vadd.f32 %v947, %v941
          %v949 = vadd.f32 %v948, %v943
          %v950 = vld [vmem:[#allocation4] sm:$0x1]
          %v951 = vadd.f32 %v932, %v935
          %v952 = vrot.slane %v951, 4
          %v953 = vadd.f32 %v951, %v952
          %v954 = vrot.slane %v953, 2
          %v955 = vadd.f32 %v953, %v954
          %v956 = vrot.slane %v955, 1
          %v957 = vadd.f32 %v955, %v956
          %v958 = vadd.f32 %v950, %v957
          %959 = vst [vmem:[#allocation4] sm:$0x1] %v958
          %v960 = vld [vmem:[#allocation5] sm:$0x1]
          %v961 = vadd.f32 %v946, %v949
          %v962 = vrot.slane %v961, 4
          %v963 = vadd.f32 %v961, %v962
          %v964 = vrot.slane %v963, 2
          %v965 = vadd.f32 %v963, %v964
          %v966 = vrot.slane %v965, 1
          %v967 = vadd.f32 %v965, %v966
          %v968 = vadd.f32 %v960, %v967
          %969 = vst [vmem:[#allocation5] sm:$0x1] %v968
          // Predicated region
          $region77: #{tpu_custom_call.1} parent=71 // pred_check
            %p970 = pneg %p568
          $region78: #{tpu_custom_call.1} parent=71 // pred_check_branch
            %972 = sbr.rel (%p970) target = $region80
          $region79: #{tpu_custom_call.1} parent=71 // pred_region
            %v973 = vld [vmem:[#allocation4] sm:$0x1]
            %v974 = vmul.f32 %v973, 0.015625
            %v975 = vld [vmem:[#allocation5] sm:$0x1]
            %v976 = vmul.f32 %v975, 0.015625
            %v977 = vmul.f32 %v974, %v974
            %v978 = vsub.f32 %v976, %v977
            %v979 = vmax.f32 %v978, 0.0
            %980 = vst [vmem:[#allocation4] sm:$0x1] %v974
            %v981 = vadd.f32 %v979, 1e-05
            %v982 = vrsqrt.pop %v981
            %983 = vst [vmem:[#allocation5] sm:$0x1] %v982
          $region80: #{tpu_custom_call.1} parent=71 // pred_fallthru
            _
        $region72: #{tpu_custom_call.1} parent=43 // pred_fallthru
          _
        %p984 = scmp.eq.s32.totalorder %s24, 2
        // Predicated region
        $region81: #{tpu_custom_call.1} parent=43 // pred_check
          %p985 = pneg %p984
        $region82: #{tpu_custom_call.1} parent=43 // pred_check_branch
          %987 = sbr.rel (%p985) target = $region84
        $region83: #{tpu_custom_call.1} parent=43 // pred_region
          %v988 = vld [vmem:[#allocation9] sm:$0xf]
          %v989 = vld [vmem:[#allocation9 + $0x4] sm:$0xf]
          %v990 = vld [vmem:[#allocation9 + $0x8] sm:$0xf]
          %v991 = vld [vmem:[#allocation9 + $0xc] sm:$0xf]
          %v992 = vld [vmem:[#allocation9 + $0x10] sm:$0xf]
          %v993 = vld [vmem:[#allocation9 + $0x14] sm:$0xf]
          %v994 = vld [vmem:[#allocation9 + $0x18] sm:$0xf]
          %v995 = vld [vmem:[#allocation9 + $0x1c] sm:$0xf]
          %v996 = vld [vmem:[#allocation9 + $0x20] sm:$0xf]
          %v997 = vld [vmem:[#allocation9 + $0x24] sm:$0xf]
          %v998 = vld [vmem:[#allocation9 + $0x28] sm:$0xf]
          %v999 = vld [vmem:[#allocation9 + $0x2c] sm:$0xf]
          %v1000 = vld [vmem:[#allocation9 + $0x30] sm:$0xf]
          %v1001 = vld [vmem:[#allocation9 + $0x34] sm:$0xf]
          %v1002 = vld [vmem:[#allocation9 + $0x38] sm:$0xf]
          %v1003 = vld [vmem:[#allocation9 + $0x3c] sm:$0xf]
          %v1004 = vld [vmem:[%s3] sm:$0x1]
          %v1006 = vlaneseq
          %v1007 = vshrl.u32 %v1006, 7
          %v1008 = vsub.s32 0, %v1007
          %v1009 = vrot.slane %v1004, %v1008
          %v1019 = vunpack.c.l.b16 %v312
          %v1020 = vunpack.c.l.b16 %v313
          %v1021 = vunpack.c.l.b16 %v314
          %v1022 = vunpack.c.l.b16 %v315
          %v1023 = vunpack.c.l.b16 %v316
          %v1024 = vunpack.c.l.b16 %v317
          %v1025 = vunpack.c.l.b16 %v318
          %v1026 = vunpack.c.l.b16 %v319
          %v1027 = vpack.c.b16 %v1020, %v1019
          %v1028 = vpack.c.b16 %v1022, %v1021
          %v1029 = vpack.c.b16 %v1024, %v1023
          %v1030 = vpack.c.b16 %v1026, %v1025
          %v1051 = vunpack.c.l.b16 %v988
          %v1052 = vunpack.c.l.b16 %v989
          %v1053 = vunpack.c.l.b16 %v990
          %v1054 = vunpack.c.l.b16 %v991
          %v1055 = vunpack.c.l.b16 %v992
          %v1056 = vunpack.c.l.b16 %v993
          %v1057 = vunpack.c.l.b16 %v994
          %v1058 = vunpack.c.l.b16 %v995
          %v1059 = vunpack.c.l.b16 %v996
          %v1060 = vunpack.c.l.b16 %v997
          %v1061 = vunpack.c.l.b16 %v998
          %v1062 = vunpack.c.l.b16 %v999
          %v1063 = vunpack.c.l.b16 %v1000
          %v1064 = vunpack.c.l.b16 %v1001
          %v1065 = vunpack.c.l.b16 %v1002
          %v1066 = vunpack.c.l.b16 %v1003
          %v1067 = vpack.c.b16 %v1052, %v1051
          %v1068 = vpack.c.b16 %v1054, %v1053
          %v1069 = vpack.c.b16 %v1056, %v1055
          %v1070 = vpack.c.b16 %v1058, %v1057
          %v1071 = vpack.c.b16 %v1060, %v1059
          %v1072 = vpack.c.b16 %v1062, %v1061
          %v1073 = vpack.c.b16 %v1064, %v1063
          %v1074 = vpack.c.b16 %v1066, %v1065
          %1083 = vmatprep.subr.bf16.mxu0 0
          %1084 = vmatpush1.bf16.msra.mxu0 %v1074
          %1085 = vmatprep.subr.bf16.mxu0 0
          %1086 = vmatpush1.bf16.msra.mxu0 %v1073
          %1087 = vmatprep.subr.bf16.mxu0 0
          %1088 = vmatpush1.bf16.msra.mxu0 %v1072
          %1089 = vmatprep.subr.bf16.mxu0 0
          %1090 = vmatpush1.bf16.msra.mxu0 %v1071
          %1091 = vmatprep.subr.bf16.mxu0 0
          %1092 = vmatpush1.bf16.msra.mxu0 %v1070
          %1093 = vmatprep.subr.bf16.mxu0 0
          %1094 = vmatpush1.bf16.msra.mxu0 %v1069
          %1095 = vmatprep.subr.bf16.mxu0 0
          %1096 = vmatpush1.bf16.msra.mxu0 %v1068
          %1097 = vmatprep.subr.bf16.mxu0 0
          %1098 = vmatpush1.bf16.msra.mxu0 %v1067
          %1099 = vmatprep.subr.bf16.mxu0 0
          %1100 = vmatpush2.bf16.msra.mxu0 0
          %1101 = vmatprep.subr.bf16.mxu0 0
          %1102 = vmatpush2.bf16.msra.mxu0 0
          %1103 = vmatprep.subr.bf16.mxu0 0
          %1104 = vmatpush2.bf16.msra.mxu0 0
          %1105 = vmatprep.subr.bf16.mxu0 0
          %1106 = vmatpush2.bf16.msra.mxu0 0
          %1107 = vmatprep.subr.bf16.mxu0 0
          %1108 = vmatpush2.bf16.msra.mxu0 0
          %1109 = vmatprep.subr.bf16.mxu0 0
          %1110 = vmatpush2.bf16.msra.mxu0 0
          %1111 = vmatprep.subr.bf16.mxu0 0
          %1112 = vmatpush2.bf16.msra.mxu0 0
          %1113 = vmatprep.subr.bf16.mxu0 0
          %1114 = vmatpush2.bf16.msra.mxu0 0
          %1115 = vmatprep.mubr.bf16.mxu0 0
          %1116 = vmatmul.mubr.bf16.gmra.mxu0 %v1027
          %v1117 = vpop.f32.mrf.mxu0
          %v1118 = vadd.f32 %v1009, %v1117
          %v1119 = vpop.f32.mrf.mxu0
          %v1120 = vpop.f32.mrf.mxu0
          %v1121 = vadd.f32 %v1009, %v1120
          %v1122 = vpop.f32.mrf.mxu0
          %1123 = vmatprep.mubr.bf16.mxu0 0
          %1124 = vmatmul.mubr.bf16.gmra.mxu0 %v1028
          %v1125 = vpop.f32.mrf.mxu0
          %v1126 = vadd.f32 %v1009, %v1125
          %v1127 = vpop.f32.mrf.mxu0
          %v1128 = vpop.f32.mrf.mxu0
          %v1129 = vadd.f32 %v1009, %v1128
          %v1130 = vpop.f32.mrf.mxu0
          %1131 = vmatprep.mubr.bf16.mxu0 0
          %1132 = vmatmul.mubr.bf16.gmra.mxu0 %v1029
          %v1133 = vpop.f32.mrf.mxu0
          %v1134 = vadd.f32 %v1009, %v1133
          %v1135 = vpop.f32.mrf.mxu0
          %v1136 = vpop.f32.mrf.mxu0
          %v1137 = vadd.f32 %v1009, %v1136
          %v1138 = vpop.f32.mrf.mxu0
          %1139 = vmatprep.mubr.bf16.mxu0 0
          %1140 = vmatmul.mubr.bf16.gmra.mxu0 %v1030
          %v1141 = vpop.f32.mrf.mxu0
          %v1142 = vadd.f32 %v1009, %v1141
          %v1143 = vpop.f32.mrf.mxu0
          %v1144 = vpop.f32.mrf.mxu0
          %v1145 = vadd.f32 %v1009, %v1144
          %v1146 = vpop.f32.mrf.mxu0
          %1147 = vdwg.mxu0
          %v1148 = vld [vmem:[#allocation2] sm:$0x1]
          %v1150 = vlaneseq
          %v1151 = vshrl.u32 %v1150, 7
          %v1152 = vsub.s32 0, %v1151
          %v1153 = vrot.slane %v1148, %v1152
          %v1155 = vsub.f32 %v1118, %v1153
          %v1156 = vsub.f32 %v1121, %v1153
          %v1157 = vsub.f32 %v1126, %v1153
          %v1158 = vsub.f32 %v1129, %v1153
          %v1159 = vsub.f32 %v1134, %v1153
          %v1160 = vsub.f32 %v1137, %v1153
          %v1161 = vsub.f32 %v1142, %v1153
          %v1162 = vsub.f32 %v1145, %v1153
          %v1163 = vld [vmem:[#allocation3] sm:$0x1]
          %v1165 = vlaneseq
          %v1166 = vshrl.u32 %v1165, 7
          %v1167 = vsub.s32 0, %v1166
          %v1168 = vrot.slane %v1163, %v1167
          %v1170 = vmul.f32 %v1155, %v1168
          %v1171 = vmul.f32 %v1156, %v1168
          %v1172 = vmul.f32 %v1157, %v1168
          %v1173 = vmul.f32 %v1158, %v1168
          %v1174 = vmul.f32 %v1159, %v1168
          %v1175 = vmul.f32 %v1160, %v1168
          %v1176 = vmul.f32 %v1161, %v1168
          %v1177 = vmul.f32 %v1162, %v1168
          %v1178 = vmax.f32 %v1170, 0.0
          %v1179 = vmax.f32 %v1171, 0.0
          %v1180 = vmax.f32 %v1172, 0.0
          %v1181 = vmax.f32 %v1173, 0.0
          %v1182 = vmax.f32 %v1174, 0.0
          %v1183 = vmax.f32 %v1175, 0.0
          %v1184 = vmax.f32 %v1176, 0.0
          %v1185 = vmax.f32 %v1177, 0.0
          %v1186 = vpack.c.bf16 %v1179, %v1178
          %v1187 = vpack.c.bf16 %v1181, %v1180
          %v1188 = vpack.c.bf16 %v1183, %v1182
          %v1189 = vpack.c.bf16 %v1185, %v1184
          %v1190 = vld [vmem:[#allocation11] sm:$0xf]
          %v1191 = vld [vmem:[#allocation11 + $0x4] sm:$0xf]
          %v1192 = vld [vmem:[#allocation11 + $0x8] sm:$0xf]
          %v1193 = vld [vmem:[#allocation11 + $0xc] sm:$0xf]
          %v1194 = vld [vmem:[#allocation11 + $0x10] sm:$0xf]
          %v1195 = vld [vmem:[#allocation11 + $0x14] sm:$0xf]
          %v1196 = vld [vmem:[#allocation11 + $0x18] sm:$0xf]
          %v1197 = vld [vmem:[#allocation11 + $0x1c] sm:$0xf]
          %v1198 = vld [vmem:[#allocation11 + $0x20] sm:$0xf]
          %v1199 = vld [vmem:[#allocation11 + $0x24] sm:$0xf]
          %v1200 = vld [vmem:[#allocation11 + $0x28] sm:$0xf]
          %v1201 = vld [vmem:[#allocation11 + $0x2c] sm:$0xf]
          %v1202 = vld [vmem:[#allocation11 + $0x30] sm:$0xf]
          %v1203 = vld [vmem:[#allocation11 + $0x34] sm:$0xf]
          %v1204 = vld [vmem:[#allocation11 + $0x38] sm:$0xf]
          %v1205 = vld [vmem:[#allocation11 + $0x3c] sm:$0xf]
          %v1206 = vld [vmem:[%s5] sm:$0x1]
          %v1208 = vlaneseq
          %v1209 = vshrl.u32 %v1208, 7
          %v1210 = vsub.s32 0, %v1209
          %v1211 = vrot.slane %v1206, %v1210
          %v1229 = vunpack.c.l.b16 %v1190
          %v1230 = vunpack.c.l.b16 %v1191
          %v1231 = vunpack.c.l.b16 %v1192
          %v1232 = vunpack.c.l.b16 %v1193
          %v1233 = vunpack.c.l.b16 %v1194
          %v1234 = vunpack.c.l.b16 %v1195
          %v1235 = vunpack.c.l.b16 %v1196
          %v1236 = vunpack.c.l.b16 %v1197
          %v1237 = vunpack.c.l.b16 %v1198
          %v1238 = vunpack.c.l.b16 %v1199
          %v1239 = vunpack.c.l.b16 %v1200
          %v1240 = vunpack.c.l.b16 %v1201
          %v1241 = vunpack.c.l.b16 %v1202
          %v1242 = vunpack.c.l.b16 %v1203
          %v1243 = vunpack.c.l.b16 %v1204
          %v1244 = vunpack.c.l.b16 %v1205
          %v1245 = vpack.c.b16 %v1230, %v1229
          %v1246 = vpack.c.b16 %v1232, %v1231
          %v1247 = vpack.c.b16 %v1234, %v1233
          %v1248 = vpack.c.b16 %v1236, %v1235
          %v1249 = vpack.c.b16 %v1238, %v1237
          %v1250 = vpack.c.b16 %v1240, %v1239
          %v1251 = vpack.c.b16 %v1242, %v1241
          %v1252 = vpack.c.b16 %v1244, %v1243
          %1261 = vmatprep.subr.bf16.mxu0 0
          %1262 = vmatpush1.bf16.msra.mxu0 %v1252
          %1263 = vmatprep.subr.bf16.mxu0 0
          %1264 = vmatpush1.bf16.msra.mxu0 %v1251
          %1265 = vmatprep.subr.bf16.mxu0 0
          %1266 = vmatpush1.bf16.msra.mxu0 %v1250
          %1267 = vmatprep.subr.bf16.mxu0 0
          %1268 = vmatpush1.bf16.msra.mxu0 %v1249
          %1269 = vmatprep.subr.bf16.mxu0 0
          %1270 = vmatpush1.bf16.msra.mxu0 %v1248
          %1271 = vmatprep.subr.bf16.mxu0 0
          %1272 = vmatpush1.bf16.msra.mxu0 %v1247
          %1273 = vmatprep.subr.bf16.mxu0 0
          %1274 = vmatpush1.bf16.msra.mxu0 %v1246
          %1275 = vmatprep.subr.bf16.mxu0 0
          %1276 = vmatpush1.bf16.msra.mxu0 %v1245
          %1277 = vmatprep.subr.bf16.mxu0 0
          %1278 = vmatpush2.bf16.msra.mxu0 0
          %1279 = vmatprep.subr.bf16.mxu0 0
          %1280 = vmatpush2.bf16.msra.mxu0 0
          %1281 = vmatprep.subr.bf16.mxu0 0
          %1282 = vmatpush2.bf16.msra.mxu0 0
          %1283 = vmatprep.subr.bf16.mxu0 0
          %1284 = vmatpush2.bf16.msra.mxu0 0
          %1285 = vmatprep.subr.bf16.mxu0 0
          %1286 = vmatpush2.bf16.msra.mxu0 0
          %1287 = vmatprep.subr.bf16.mxu0 0
          %1288 = vmatpush2.bf16.msra.mxu0 0
          %1289 = vmatprep.subr.bf16.mxu0 0
          %1290 = vmatpush2.bf16.msra.mxu0 0
          %1291 = vmatprep.subr.bf16.mxu0 0
          %1292 = vmatpush2.bf16.msra.mxu0 0
          %1293 = vmatprep.mubr.bf16.mxu0 0
          %1294 = vmatmul.mubr.bf16.gmra.mxu0 %v1186
          %v1295 = vpop.f32.mrf.mxu0
          %v1296 = vadd.f32 %v1211, %v1295
          %v1297 = vpop.f32.mrf.mxu0
          %v1298 = vpop.f32.mrf.mxu0
          %v1299 = vadd.f32 %v1211, %v1298
          %v1300 = vpop.f32.mrf.mxu0
          %1301 = vmatprep.mubr.bf16.mxu0 0
          %1302 = vmatmul.mubr.bf16.gmra.mxu0 %v1187
          %v1303 = vpop.f32.mrf.mxu0
          %v1304 = vadd.f32 %v1211, %v1303
          %v1305 = vpop.f32.mrf.mxu0
          %v1306 = vpop.f32.mrf.mxu0
          %v1307 = vadd.f32 %v1211, %v1306
          %v1308 = vpop.f32.mrf.mxu0
          %1309 = vmatprep.mubr.bf16.mxu0 0
          %1310 = vmatmul.mubr.bf16.gmra.mxu0 %v1188
          %v1311 = vpop.f32.mrf.mxu0
          %v1312 = vadd.f32 %v1211, %v1311
          %v1313 = vpop.f32.mrf.mxu0
          %v1314 = vpop.f32.mrf.mxu0
          %v1315 = vadd.f32 %v1211, %v1314
          %v1316 = vpop.f32.mrf.mxu0
          %1317 = vmatprep.mubr.bf16.mxu0 0
          %1318 = vmatmul.mubr.bf16.gmra.mxu0 %v1189
          %v1319 = vpop.f32.mrf.mxu0
          %v1320 = vadd.f32 %v1211, %v1319
          %v1321 = vpop.f32.mrf.mxu0
          %v1322 = vpop.f32.mrf.mxu0
          %v1323 = vadd.f32 %v1211, %v1322
          %v1324 = vpop.f32.mrf.mxu0
          %1325 = vdwg.mxu0
          %v1326 = vld [vmem:[#allocation4] sm:$0x1]
          %v1328 = vlaneseq
          %v1329 = vshrl.u32 %v1328, 7
          %v1330 = vsub.s32 0, %v1329
          %v1331 = vrot.slane %v1326, %v1330
          %v1333 = vsub.f32 %v1296, %v1331
          %v1334 = vsub.f32 %v1299, %v1331
          %v1335 = vsub.f32 %v1304, %v1331
          %v1336 = vsub.f32 %v1307, %v1331
          %v1337 = vsub.f32 %v1312, %v1331
          %v1338 = vsub.f32 %v1315, %v1331
          %v1339 = vsub.f32 %v1320, %v1331
          %v1340 = vsub.f32 %v1323, %v1331
          %v1341 = vld [vmem:[#allocation5] sm:$0x1]
          %v1343 = vlaneseq
          %v1344 = vshrl.u32 %v1343, 7
          %v1345 = vsub.s32 0, %v1344
          %v1346 = vrot.slane %v1341, %v1345
          %v1348 = vmul.f32 %v1333, %v1346
          %v1349 = vmul.f32 %v1334, %v1346
          %v1350 = vmul.f32 %v1335, %v1346
          %v1351 = vmul.f32 %v1336, %v1346
          %v1352 = vmul.f32 %v1337, %v1346
          %v1353 = vmul.f32 %v1338, %v1346
          %v1354 = vmul.f32 %v1339, %v1346
          %v1355 = vmul.f32 %v1340, %v1346
          %v1356 = vmax.f32 %v1348, 0.0
          %v1357 = vmax.f32 %v1349, 0.0
          %v1358 = vmax.f32 %v1350, 0.0
          %v1359 = vmax.f32 %v1351, 0.0
          %v1360 = vmax.f32 %v1352, 0.0
          %v1361 = vmax.f32 %v1353, 0.0
          %v1362 = vmax.f32 %v1354, 0.0
          %v1363 = vmax.f32 %v1355, 0.0
          %v1364 = vmax.f32 %v1356, %v1360
          %v1365 = vmax.f32 %v1358, %v1362
          %v1366 = vmax.f32 %v1364, %v1365
          %v1367 = vmax.f32 %v1357, %v1361
          %v1368 = vmax.f32 %v1359, %v1363
          %v1369 = vmax.f32 %v1367, %v1368
          %1370 = vst [vmem:[#allocation12] sm:$0xff] %v1366
          %1371 = vst [vmem:[#allocation12 + $0x8] sm:$0xff] %v1369
        $region84: #{tpu_custom_call.1} parent=43 // pred_fallthru
          _
        // Predicated region
        $region85: #{tpu_custom_call.1} parent=43 // pred_check
          %p1372 = pneg %p186
        $region86: #{tpu_custom_call.1} parent=43 // pred_check_branch
          %1374 = sbr.rel (%p1372) target = $region88
        $region87: #{tpu_custom_call.1} parent=43 // pred_region
          %s1375 = smul.u32 2, %s25
          %s1377 = ssub.s32 256, 256
          %1378 = vsyncadd [#allocation8], %s1377
          %s1379 = smul.addr %s1375, 128
          %s1380 = scalar_lea.hbm %s6, %s1379
          %s1381 = sshll.u32 [#allocation12], 4
          %s1382 = int_to_ptr.vmem [resolvable:$true] %s1381
          %1387 = dma.vmem_to_hbm [thread:$0]  %s1382, 256, %s1380, [#allocation8], 128, 128, 8
        $region88: #{tpu_custom_call.1} parent=43 // pred_fallthru
          _
        // Predicated region
        $region89: #{tpu_custom_call.1} parent=43 // pred_check
          %p1388 = pneg %p186
        $region90: #{tpu_custom_call.1} parent=43 // pred_check_branch
          %1390 = sbr.rel (%p1388) target = $region92
        $region91: #{tpu_custom_call.1} parent=43 // pred_region
          %1391 = dma.done [#allocation8], 256
        $region92: #{tpu_custom_call.1} parent=43 // pred_fallthru
          _
      $region44: #{tpu_custom_call.1} parent=5 // pred_fallthru
        _
      %p1392 = scmp.le.s32.totalorder 2, %s15
      // Predicated region
      $region93: #{tpu_custom_call.1} parent=5 // pred_check
        %p1393 = pneg %p1392
      $region94: #{tpu_custom_call.1} parent=5 // pred_check_branch
        %1395 = sbr.rel (%p1393) target = $region96
      $region95: #{tpu_custom_call.1} parent=5 // pred_region
        %s1396 = ssub.s32 %s15, 2
      $region96: #{tpu_custom_call.1} parent=5 // pred_fallthru
        _
    $region6: #{tpu_custom_call.1} parent=1 // loop_footer
      %s19 = sadd.s32 1, %s15
    $region7: #{tpu_custom_call.1} parent=1 // loop_footer_branch
      %14 = sbr.rel target = $region3
    $region8: #{tpu_custom_call.1} parent=1 // loop_exit
      _
    %1397 = vsyncpa [#allocation7], 1
    %s1398 = scalar_lea.sflag [#allocation7], 1
    %1399 = vsyncpa %s1398, 1
    %1400 = vsyncpa [#allocation10], 1
    %1401 = vsyncpa [#allocation8], 1
    %s1402 = scalar_lea.sflag [#allocation8], 1
    %1403 = vsyncpa %s1402, 1

</llo_original>
